<compile_context>
chip_gen: v5e
topology: v5e:2x2
jax: 0.10.0
libtpu: 0.0.40
codegen_flags: <defaults>
</compile_context>

<pallas_src>
import math

import jax
import jax.numpy as jnp
from jax.experimental import pallas as pl
from jax.experimental.pallas import tpu as pltpu

EPS = 1.1920929e-07          # np.finfo(np.float32).eps
LOG_2PI = math.log(2.0 * math.pi)


def glod_kernel(feat_ref, nhic_ref, a_t_ref, zc_ref, out_ref):
    """GLOD Gaussian-layer log-likelihood, matmul formulation.

    feat_ref : [tB, D]      penultimate features (batch tile)
    nhic_ref : [D, K_pad]   -0.5 / (covs + eps), transposed, K padded with 0
    a_t_ref  : [D, K_pad]   (centers / (covs + eps)), transposed, K padded with 0
    zc_ref   : [1, K_pad]   z_log - 0.5 * sum_d centers^2 / (covs + eps)
    out_ref  : [tB, K_pad]  log-likelihood per (sample, class)

    out[b,k] = z_log[k] - 0.5 * sum_d (f[b,d] - c[k,d])^2 / v[k,d]
             = (f^2 @ (-0.5/v)^T)[b,k] + (f @ (c/v)^T)[b,k] + zc[k]
    """
    feat = feat_ref[...]                                            # [tB, D]
    quad = jnp.dot(feat * feat, nhic_ref[...],
                   preferred_element_type=jnp.float32)              # [tB, K_pad]
    cross = jnp.dot(feat, a_t_ref[...],
                    preferred_element_type=jnp.float32)             # [tB, K_pad]
    out_ref[...] = quad + cross + zc_ref[...]


def convert_to_glod_forward(x, wproj, centers, covs):
    """x: [B, C, H, W] NCHW. Returns likelihood [B, n_classes] (float32)."""
    B, C, H, W = x.shape
    K, D = centers.shape

    # ---- synthetic backbone (wrapper-side, outside the Gaussian-layer kernel) ----
    # Lane-dense global average pool + 1x1-conv projection to the D-dim feature.
    pooled = jnp.mean(x.reshape(B, C, H * W), axis=-1)              # [B, C]
    feat = jnp.dot(pooled, wproj).astype(jnp.float32)               # [B, D]

    # ---- parameter-only precompute (depends only on centers/covs) ----
    covs_e = covs.astype(jnp.float32) + EPS                         # [K, D]
    inv_cov = 1.0 / covs_e                                          # [K, D]
    z_log = -0.5 * jnp.sum(jnp.log(covs_e), axis=-1) - 0.5 * D * LOG_2PI    # [K]
    c_term = jnp.sum(centers * centers * inv_cov, axis=-1)          # [K]
    zc = z_log - 0.5 * c_term                                       # [K]
    nhic_t = jnp.transpose(-0.5 * inv_cov)                          # [D, K]
    a_t = jnp.transpose(centers * inv_cov)                          # [D, K]

    # Pad K to a lane-dense multiple of 128; padded columns are benign zeros
    # (no log/reciprocal of padding — padding happens after all transcendentals).
    K_pad = ((K + 127) // 128) * 128
    pad_k = K_pad - K
    if pad_k:
        nhic_t = jnp.pad(nhic_t, ((0, 0), (0, pad_k)))
        a_t = jnp.pad(a_t, ((0, 0), (0, pad_k)))
        zc = jnp.pad(zc, ((0, pad_k),))
    zc = zc.reshape(1, K_pad)

    # ---- batch tiling ----
    # Large tiles (up to 512 rows) to amortize per-step overhead, but keep >= 2 grid
    # steps whenever B allows it so the 'parallel' axis spans both TCs on v7x.
    b_aligned = ((max(B, 1) + 7) // 8) * 8
    if b_aligned <= 8:
        tile_b = b_aligned
    elif b_aligned <= 1024:
        tile_b = ((((b_aligned + 1) // 2) + 7) // 8) * 8            # exactly 2 steps
    else:
        tile_b = 512
    B_pad = ((b_aligned + tile_b - 1) // tile_b) * tile_b
    feat_p = jnp.pad(feat, ((0, B_pad - B), (0, 0)))                # [B_pad, D]

    # Right-size the scoped VMEM request: double-buffered feat/out tiles, resident
    # (constant index-map) parameter matrices, plus the feat^2 intermediate.
    work_set_bytes = 4 * (
        2 * tile_b * D            # feat tile, double-buffered
        + 2 * 2 * D * K_pad       # nhic_t + a_t (resident, 2 pipeline buffers each)
        + 2 * 1 * K_pad           # zc
        + 2 * tile_b * K_pad      # out tile, double-buffered
        + tile_b * D              # feat * feat intermediate
    )
    vmem_limit = min(32 << 20, work_set_bytes + (8 << 20))

    out = pl.pallas_call(
        glod_kernel,
        out_shape=jax.ShapeDtypeStruct((B_pad, K_pad), jnp.float32),
        grid=(B_pad // tile_b,),
        in_specs=[
            pl.BlockSpec((tile_b, D), lambda i: (i, 0)),      # feat    (per-tile)
            pl.BlockSpec((D, K_pad), lambda i: (0, 0)),       # -0.5/v  (resident)
            pl.BlockSpec((D, K_pad), lambda i: (0, 0)),       # c/v     (resident)
            pl.BlockSpec((1, K_pad), lambda i: (0, 0)),       # zc      (resident)
        ],
        out_specs=pl.BlockSpec((tile_b, K_pad), lambda i: (i, 0)),
        compiler_params=pltpu.CompilerParams(
            dimension_semantics=("parallel",),
            vmem_limit_bytes=vmem_limit,
        ),
    )(feat_p, nhic_t, a_t, zc)

    return out[:B, :K]


def reference_forward(x, wproj, centers, covs):
    """Plain-JAX reference mirroring the PyTorch module exactly."""
    K, D = centers.shape
    pooled = jnp.mean(x, axis=(2, 3))
    feat = pooled @ wproj                                           # [B, D]
    covs_e = covs + EPS
    z_log = -0.5 * jnp.sum(jnp.log(covs_e), axis=-1) - 0.5 * D * LOG_2PI
    diff = feat[:, None, :] - centers[None, :, :]
    exp_log = -0.5 * jnp.sum(diff * (1.0 / covs_e)[None, :, :] * diff, axis=-1)
    return z_log[None, :] + exp_log


if __name__ == "__main__":
    B, C, H, W = 2, 4, 16, 16
    D = 2048            # GaussianLayer input_dim (ResNet-style penultimate width)
    K = 100             # num_classes default

    key = jax.random.PRNGKey(0)
    k_x, k_w, k_c, k_v = jax.random.split(key, 4)

    x = jax.random.normal(k_x, (B, C, H, W), dtype=jnp.float32)

    # Synthetic backbone projection weight (1x1 conv, C -> D).
    wproj = 0.1 * jax.random.normal(k_w, (C, D), dtype=jnp.float32)

    # GaussianLayer parameters: centers ~ 0.5*N(0,1); covs ~ 0.2 + Exp(scale=0.3).
    centers = 0.5 * jax.random.normal(k_c, (K, D), dtype=jnp.float32)
    covs = 0.2 + 0.3 * jax.random.exponential(k_v, (K, D), dtype=jnp.float32)

    out = convert_to_glod_forward(x, wproj, centers, covs)
    out = jax.block_until_ready(out)

    ref = reference_forward(x, wproj, centers, covs)
    assert out.shape == (B, K), out.shape
    assert out.dtype == jnp.float32
    # Tolerance accounts for the matmul decomposition of (f-c)^2/v accumulating
    # rounding differently from the direct form; magnitudes here are O(1e3).
    assert jnp.allclose(out, ref, rtol=1e-4, atol=1e-2), (
        float(jnp.max(jnp.abs(out - ref))))

    print("KERNEL_OK")
</pallas_src>

<mosaic_0001>
module attributes {stable_mosaic.version = 11 : i64} {
  func.func @glod_kernel(%arg0: i32, %arg1: memref<8x2048xf32, #tpu.memory_space<vmem>>, %arg2: memref<2048x128xf32, #tpu.memory_space<vmem>>, %arg3: memref<2048x128xf32, #tpu.memory_space<vmem>>, %arg4: memref<1x128xf32, #tpu.memory_space<vmem>>, %arg5: memref<8x128xf32, #tpu.memory_space<vmem>>) attributes {dimension_semantics = [#tpu.dimension_semantics<parallel>], iteration_bounds = array<i64: 1>, scalar_prefetch = 0 : i64, scratch_operands = 0 : i64, tpu.core_type = #tpu.core_type<tc>, window_params = [{transform_indices = @transform_0, window_bounds = array<i64: 8, 2048>}, {pipeline_mode = #tpu.pipeline_mode<synchronous>, transform_indices = @transform_1, window_bounds = array<i64: 2048, 128>}, {pipeline_mode = #tpu.pipeline_mode<synchronous>, transform_indices = @transform_2, window_bounds = array<i64: 2048, 128>}, {pipeline_mode = #tpu.pipeline_mode<synchronous>, transform_indices = @transform_3, window_bounds = array<i64: 1, 128>}, {transform_indices = @transform_4, window_bounds = array<i64: 8, 128>}]} {
    %c0 = arith.constant 0 : index
    %c0_0 = arith.constant 0 : index
    %0 = vector.load %arg1[%c0, %c0_0] : memref<8x2048xf32, #tpu.memory_space<vmem>>, vector<8x2048xf32>
    %1 = arith.mulf %0, %0 : vector<8x2048xf32>
    %c0_1 = arith.constant 0 : index
    %c0_2 = arith.constant 0 : index
    %2 = vector.load %arg2[%c0_1, %c0_2] : memref<2048x128xf32, #tpu.memory_space<vmem>>, vector<2048x128xf32>
    %cst = arith.constant dense<0.000000e+00> : vector<8x128xf32>
    %3 = tpu.matmul %1, %2, %cst {dimension_numbers = #tpu.dot_dimension_numbers<[1], [0], [0], [1], [0, 0, 1, 1], [], []>} : vector<8x2048xf32>, vector<2048x128xf32>, vector<8x128xf32> -> vector<8x128xf32>
    %c0_3 = arith.constant 0 : index
    %c0_4 = arith.constant 0 : index
    %4 = vector.load %arg3[%c0_3, %c0_4] : memref<2048x128xf32, #tpu.memory_space<vmem>>, vector<2048x128xf32>
    %cst_5 = arith.constant dense<0.000000e+00> : vector<8x128xf32>
    %5 = tpu.matmul %0, %4, %cst_5 {dimension_numbers = #tpu.dot_dimension_numbers<[1], [0], [0], [1], [0, 0, 1, 1], [], []>} : vector<8x2048xf32>, vector<2048x128xf32>, vector<8x128xf32> -> vector<8x128xf32>
    %6 = arith.addf %3, %5 : vector<8x128xf32>
    %c0_6 = arith.constant 0 : index
    %c0_7 = arith.constant 0 : index
    %7 = vector.load %arg4[%c0_6, %c0_7] : memref<1x128xf32, #tpu.memory_space<vmem>>, vector<1x128xf32>
    %8 = vector.broadcast %7 : vector<1x128xf32> to vector<8x128xf32>
    %9 = arith.addf %6, %8 : vector<8x128xf32>
    %c0_8 = arith.constant 0 : index
    %c0_9 = arith.constant 0 : index
    %10 = vector.load %arg5[%c0_8, %c0_9] : memref<8x128xf32, #tpu.memory_space<vmem>>, vector<8x128xf32>
    tpu.vector_store %arg5[%c0_8, %c0_9], %9 {strides = array<i32>} : memref<8x128xf32, #tpu.memory_space<vmem>>, vector<8x128xf32>,
    return
  }
  func.func @transform_0(%arg0: i32) -> (i32, i32) {
    %c0_i32 = arith.constant 0 : i32
    %c0_i32_0 = arith.constant 0 : i32
    return %arg0, %c0_i32 : i32, i32
  }
  func.func @transform_1(%arg0: i32) -> (i32, i32) {
    %c0_i32 = arith.constant 0 : i32
    %c0_i32_0 = arith.constant 0 : i32
    %c0_i32_1 = arith.constant 0 : i32
    return %c0_i32, %c0_i32_0 : i32, i32
  }
  func.func @transform_2(%arg0: i32) -> (i32, i32) {
    %c0_i32 = arith.constant 0 : i32
    %c0_i32_0 = arith.constant 0 : i32
    %c0_i32_1 = arith.constant 0 : i32
    return %c0_i32, %c0_i32_0 : i32, i32
  }
  func.func @transform_3(%arg0: i32) -> (i32, i32) {
    %c0_i32 = arith.constant 0 : i32
    %c0_i32_0 = arith.constant 0 : i32
    %c0_i32_1 = arith.constant 0 : i32
    return %c0_i32, %c0_i32_0 : i32, i32
  }
  func.func @transform_4(%arg0: i32) -> (i32, i32) {
    %c0_i32 = arith.constant 0 : i32
    %c0_i32_0 = arith.constant 0 : i32
    return %arg0, %c0_i32 : i32, i32
  }
}

</mosaic_0001>

<llo_original>
// kernel: tpu_custom_call.1
$region0: #{tpu_custom_call.1}
  #allocation0 [shape = 'u32[]', space=smem, size = 0x4, offset = 0x4, fixed_abs, tag = 'smem constant byte address 0x4 - core index']
  #allocation1 [shape = 'u32[72,128]{1,0:T(1,128)}', space=vmem, size = 0x9000, scoped, tag = 'internal scratch']
  %s0 = inlined_call_operand.hbm [shape: f32[8,2048], index: 0, kind: input, shape index: {}]
  %s1 = inlined_call_operand.hbm [shape: f32[2048,128], index: 1, kind: input, shape index: {}]
  %s2 = inlined_call_operand.hbm [shape: f32[2048,128], index: 2, kind: input, shape index: {}]
  %s3 = inlined_call_operand.vmem [shape: f32[1,128], index: 3, kind: input, shape index: {}]
  %s4 = inlined_call_operand.hbm [shape: f32[8,128], index: 4, kind: output, shape index: {}]
  %s5 = sld [smem:[#allocation0]]
  $region38: #{tpu_custom_call.1} parent=0
    _
  %s7 = ssub.s32 1, %s5
  %s8 = scalar_select 0, %s7, %s5
  $region1: #{tpu_custom_call.1} parent=0
    #allocation2 [shape = 'u8[65536]{0}', space=vmem, size = 0x10000, scoped, tag = 'input window, operand 0, single buffered']
    #allocation3 [shape = 's32[1]{0}', space=sflag, size = 0x4, scoped, tag = 'scoped memory for tpu_custom_call.1']
    #allocation4 [shape = 's32[1]{0}', space=sflag, size = 0x4, scoped, tag = 'scoped memory for tpu_custom_call.1']
    #allocation5 [shape = 'u8[1048576]{0}', space=vmem, size = 0x100000, scoped, tag = 'input window, operand 1, single buffered']
    #allocation6 [shape = 's32[1]{0}', space=sflag, size = 0x4, scoped, tag = 'scoped memory for tpu_custom_call.1']
    #allocation7 [shape = 'u8[1048576]{0}', space=vmem, size = 0x100000, scoped, tag = 'input window, operand 2, single buffered']
    #allocation8 [shape = 'u8[4096]{0}', space=vmem, size = 0x1000, scoped, tag = 'output window, operand 0, single buffered']
    %9 = vsyncpa [#allocation3], 0
    %10 = vsyncpa [#allocation6], 0
    %11 = vsyncpa [#allocation4], 0
    // Predicated region
    $region2: #{tpu_custom_call.1} parent=1 // pred_check
      _
    $region3: #{tpu_custom_call.1} parent=1 // pred_check_branch
      %13 = sbr.rel (0) target = $region5
    $region4: #{tpu_custom_call.1} parent=1 // pred_region
      %15 = vsyncadd [#allocation3], 0
      %s17 = sshll.u32 %s0, 4
      %s18 = int_to_ptr.hbm [resolvable:$true] %s17
      %s19 = sshll.u32 [#allocation2], 4
      %s20 = int_to_ptr.vmem [resolvable:$true] %s19
      %22 = dma.hbm_to_vmem [thread:$0]  %s18, 2048, %s20, [#allocation3]
    $region5: #{tpu_custom_call.1} parent=1 // pred_fallthru
      _
    // Predicated region
    $region6: #{tpu_custom_call.1} parent=1 // pred_check
      _
    $region7: #{tpu_custom_call.1} parent=1 // pred_check_branch
      %24 = sbr.rel (0) target = $region9
    $region8: #{tpu_custom_call.1} parent=1 // pred_region
      %26 = vsyncadd [#allocation6], 0
      %s27 = sshll.u32 %s1, 4
      %s28 = int_to_ptr.hbm [resolvable:$true] %s27
      %s29 = sshll.u32 [#allocation5], 4
      %s30 = int_to_ptr.vmem [resolvable:$true] %s29
      %35 = dma.hbm_to_vmem [thread:$0]  %s28, 32768, %s30, [#allocation6], 128, 128, 8
    $region9: #{tpu_custom_call.1} parent=1 // pred_fallthru
      _
    // Predicated region
    $region10: #{tpu_custom_call.1} parent=1 // pred_check
      _
    $region11: #{tpu_custom_call.1} parent=1 // pred_check_branch
      %37 = sbr.rel (0) target = $region13
    $region12: #{tpu_custom_call.1} parent=1 // pred_region
      %39 = vsyncadd [#allocation6], 0
      %s40 = sshll.u32 %s2, 4
      %s41 = int_to_ptr.hbm [resolvable:$true] %s40
      %s42 = sshll.u32 [#allocation7], 4
      %s43 = int_to_ptr.vmem [resolvable:$true] %s42
      %48 = dma.hbm_to_vmem [thread:$0]  %s41, 32768, %s43, [#allocation6], 128, 128, 8
    $region13: #{tpu_custom_call.1} parent=1 // pred_fallthru
      _
    // Predicated region
    $region14: #{tpu_custom_call.1} parent=1 // pred_check
      _
    $region15: #{tpu_custom_call.1} parent=1 // pred_check_branch
      %50 = sbr.rel (0) target = $region17
    $region16: #{tpu_custom_call.1} parent=1 // pred_region
      _
    $region17: #{tpu_custom_call.1} parent=1 // pred_fallthru
      _
    // Predicated region
    $region18: #{tpu_custom_call.1} parent=1 // pred_check
      _
    $region19: #{tpu_custom_call.1} parent=1 // pred_check_branch
      %52 = sbr.rel (0) target = $region21
    $region20: #{tpu_custom_call.1} parent=1 // pred_region
      %54 = dma.done [#allocation3], 2048
    $region21: #{tpu_custom_call.1} parent=1 // pred_fallthru
      _
    // Predicated region
    $region22: #{tpu_custom_call.1} parent=1 // pred_check
      _
    $region23: #{tpu_custom_call.1} parent=1 // pred_check_branch
      %56 = sbr.rel (0) target = $region25
    $region24: #{tpu_custom_call.1} parent=1 // pred_region
      %58 = dma.done [#allocation6], 32768
    $region25: #{tpu_custom_call.1} parent=1 // pred_fallthru
      _
    // Predicated region
    $region26: #{tpu_custom_call.1} parent=1 // pred_check
      _
    $region27: #{tpu_custom_call.1} parent=1 // pred_check_branch
      %60 = sbr.rel (0) target = $region29
    $region28: #{tpu_custom_call.1} parent=1 // pred_region
      %62 = dma.done [#allocation6], 32768
    $region29: #{tpu_custom_call.1} parent=1 // pred_fallthru
      _
    %v63 = vld [vmem:[#allocation2] sm:$0xff]
    %v64 = vld [vmem:[#allocation2 + $0x8] sm:$0xff]
    %v65 = vld [vmem:[#allocation2 + $0x10] sm:$0xff]
    %v66 = vld [vmem:[#allocation2 + $0x18] sm:$0xff]
    %v67 = vld [vmem:[#allocation2 + $0x20] sm:$0xff]
    %v68 = vld [vmem:[#allocation2 + $0x28] sm:$0xff]
    %v69 = vld [vmem:[#allocation2 + $0x30] sm:$0xff]
    %v70 = vld [vmem:[#allocation2 + $0x38] sm:$0xff]
    %v71 = vld [vmem:[#allocation2 + $0x40] sm:$0xff]
    %v72 = vld [vmem:[#allocation2 + $0x48] sm:$0xff]
    %v73 = vld [vmem:[#allocation2 + $0x50] sm:$0xff]
    %v74 = vld [vmem:[#allocation2 + $0x58] sm:$0xff]
    %v75 = vld [vmem:[#allocation2 + $0x60] sm:$0xff]
    %v76 = vld [vmem:[#allocation2 + $0x68] sm:$0xff]
    %v77 = vld [vmem:[#allocation2 + $0x70] sm:$0xff]
    %v78 = vld [vmem:[#allocation2 + $0x78] sm:$0xff]
    %v79 = vmul.f32 %v63, %v63
    %v80 = vmul.f32 %v64, %v64
    %v81 = vmul.f32 %v65, %v65
    %v82 = vmul.f32 %v66, %v66
    %v83 = vmul.f32 %v67, %v67
    %v84 = vmul.f32 %v68, %v68
    %v85 = vmul.f32 %v69, %v69
    %v86 = vmul.f32 %v70, %v70
    %v87 = vmul.f32 %v71, %v71
    %v88 = vmul.f32 %v72, %v72
    %v89 = vmul.f32 %v73, %v73
    %v90 = vmul.f32 %v74, %v74
    %v91 = vmul.f32 %v75, %v75
    %v92 = vmul.f32 %v76, %v76
    %v93 = vmul.f32 %v77, %v77
    %v94 = vmul.f32 %v78, %v78
    %v95 = vld [vmem:[#allocation5] sm:$0xff]
    %v96 = vld [vmem:[#allocation5 + $0x8] sm:$0xff]
    %v97 = vld [vmem:[#allocation5 + $0x10] sm:$0xff]
    %v98 = vld [vmem:[#allocation5 + $0x18] sm:$0xff]
    %v99 = vld [vmem:[#allocation5 + $0x20] sm:$0xff]
    %v100 = vld [vmem:[#allocation5 + $0x28] sm:$0xff]
    %v101 = vld [vmem:[#allocation5 + $0x30] sm:$0xff]
    %v102 = vld [vmem:[#allocation5 + $0x38] sm:$0xff]
    %v103 = vld [vmem:[#allocation5 + $0x40] sm:$0xff]
    %v104 = vld [vmem:[#allocation5 + $0x48] sm:$0xff]
    %v105 = vld [vmem:[#allocation5 + $0x50] sm:$0xff]
    %v106 = vld [vmem:[#allocation5 + $0x58] sm:$0xff]
    %v107 = vld [vmem:[#allocation5 + $0x60] sm:$0xff]
    %v108 = vld [vmem:[#allocation5 + $0x68] sm:$0xff]
    %v109 = vld [vmem:[#allocation5 + $0x70] sm:$0xff]
    %v110 = vld [vmem:[#allocation5 + $0x78] sm:$0xff]
    %v111 = vld [vmem:[#allocation5 + $0x80] sm:$0xff]
    %v112 = vld [vmem:[#allocation5 + $0x88] sm:$0xff]
    %v113 = vld [vmem:[#allocation5 + $0x90] sm:$0xff]
    %v114 = vld [vmem:[#allocation5 + $0x98] sm:$0xff]
    %v115 = vld [vmem:[#allocation5 + $0xa0] sm:$0xff]
    %v116 = vld [vmem:[#allocation5 + $0xa8] sm:$0xff]
    %v117 = vld [vmem:[#allocation5 + $0xb0] sm:$0xff]
    %v118 = vld [vmem:[#allocation5 + $0xb8] sm:$0xff]
    %v119 = vld [vmem:[#allocation5 + $0xc0] sm:$0xff]
    %v120 = vld [vmem:[#allocation5 + $0xc8] sm:$0xff]
    %v121 = vld [vmem:[#allocation5 + $0xd0] sm:$0xff]
    %v122 = vld [vmem:[#allocation5 + $0xd8] sm:$0xff]
    %v123 = vld [vmem:[#allocation5 + $0xe0] sm:$0xff]
    %v124 = vld [vmem:[#allocation5 + $0xe8] sm:$0xff]
    %v125 = vld [vmem:[#allocation5 + $0xf0] sm:$0xff]
    %v126 = vld [vmem:[#allocation5 + $0xf8] sm:$0xff]
    %v127 = vld [vmem:[#allocation5 + $0x100] sm:$0xff]
    %v128 = vld [vmem:[#allocation5 + $0x108] sm:$0xff]
    %v129 = vld [vmem:[#allocation5 + $0x110] sm:$0xff]
    %v130 = vld [vmem:[#allocation5 + $0x118] sm:$0xff]
    %v131 = vld [vmem:[#allocation5 + $0x120] sm:$0xff]
    %v132 = vld [vmem:[#allocation5 + $0x128] sm:$0xff]
    %v133 = vld [vmem:[#allocation5 + $0x130] sm:$0xff]
    %v134 = vld [vmem:[#allocation5 + $0x138] sm:$0xff]
    %v135 = vld [vmem:[#allocation5 + $0x140] sm:$0xff]
    %v136 = vld [vmem:[#allocation5 + $0x148] sm:$0xff]
    %v137 = vld [vmem:[#allocation5 + $0x150] sm:$0xff]
    %v138 = vld [vmem:[#allocation5 + $0x158] sm:$0xff]
    %v139 = vld [vmem:[#allocation5 + $0x160] sm:$0xff]
    %v140 = vld [vmem:[#allocation5 + $0x168] sm:$0xff]
    %v141 = vld [vmem:[#allocation5 + $0x170] sm:$0xff]
    %v142 = vld [vmem:[#allocation5 + $0x178] sm:$0xff]
    %v143 = vld [vmem:[#allocation5 + $0x180] sm:$0xff]
    %v144 = vld [vmem:[#allocation5 + $0x188] sm:$0xff]
    %v145 = vld [vmem:[#allocation5 + $0x190] sm:$0xff]
    %v146 = vld [vmem:[#allocation5 + $0x198] sm:$0xff]
    %v147 = vld [vmem:[#allocation5 + $0x1a0] sm:$0xff]
    %v148 = vld [vmem:[#allocation5 + $0x1a8] sm:$0xff]
    %v149 = vld [vmem:[#allocation5 + $0x1b0] sm:$0xff]
    %v150 = vld [vmem:[#allocation5 + $0x1b8] sm:$0xff]
    %v151 = vld [vmem:[#allocation5 + $0x1c0] sm:$0xff]
    %v152 = vld [vmem:[#allocation5 + $0x1c8] sm:$0xff]
    %v153 = vld [vmem:[#allocation5 + $0x1d0] sm:$0xff]
    %v154 = vld [vmem:[#allocation5 + $0x1d8] sm:$0xff]
    %v155 = vld [vmem:[#allocation5 + $0x1e0] sm:$0xff]
    %v156 = vld [vmem:[#allocation5 + $0x1e8] sm:$0xff]
    %v157 = vld [vmem:[#allocation5 + $0x1f0] sm:$0xff]
    %v158 = vld [vmem:[#allocation5 + $0x1f8] sm:$0xff]
    %v159 = vld [vmem:[#allocation5 + $0x200] sm:$0xff]
    %v160 = vld [vmem:[#allocation5 + $0x208] sm:$0xff]
    %v161 = vld [vmem:[#allocation5 + $0x210] sm:$0xff]
    %v162 = vld [vmem:[#allocation5 + $0x218] sm:$0xff]
    %v163 = vld [vmem:[#allocation5 + $0x220] sm:$0xff]
    %v164 = vld [vmem:[#allocation5 + $0x228] sm:$0xff]
    %v165 = vld [vmem:[#allocation5 + $0x230] sm:$0xff]
    %v166 = vld [vmem:[#allocation5 + $0x238] sm:$0xff]
    %v167 = vld [vmem:[#allocation5 + $0x240] sm:$0xff]
    %v168 = vld [vmem:[#allocation5 + $0x248] sm:$0xff]
    %v169 = vld [vmem:[#allocation5 + $0x250] sm:$0xff]
    %v170 = vld [vmem:[#allocation5 + $0x258] sm:$0xff]
    %v171 = vld [vmem:[#allocation5 + $0x260] sm:$0xff]
    %v172 = vld [vmem:[#allocation5 + $0x268] sm:$0xff]
    %v173 = vld [vmem:[#allocation5 + $0x270] sm:$0xff]
    %v174 = vld [vmem:[#allocation5 + $0x278] sm:$0xff]
    %v175 = vld [vmem:[#allocation5 + $0x280] sm:$0xff]
    %v176 = vld [vmem:[#allocation5 + $0x288] sm:$0xff]
    %v177 = vld [vmem:[#allocation5 + $0x290] sm:$0xff]
    %v178 = vld [vmem:[#allocation5 + $0x298] sm:$0xff]
    %v179 = vld [vmem:[#allocation5 + $0x2a0] sm:$0xff]
    %v180 = vld [vmem:[#allocation5 + $0x2a8] sm:$0xff]
    %v181 = vld [vmem:[#allocation5 + $0x2b0] sm:$0xff]
    %v182 = vld [vmem:[#allocation5 + $0x2b8] sm:$0xff]
    %v183 = vld [vmem:[#allocation5 + $0x2c0] sm:$0xff]
    %v184 = vld [vmem:[#allocation5 + $0x2c8] sm:$0xff]
    %v185 = vld [vmem:[#allocation5 + $0x2d0] sm:$0xff]
    %v186 = vld [vmem:[#allocation5 + $0x2d8] sm:$0xff]
    %v187 = vld [vmem:[#allocation5 + $0x2e0] sm:$0xff]
    %v188 = vld [vmem:[#allocation5 + $0x2e8] sm:$0xff]
    %v189 = vld [vmem:[#allocation5 + $0x2f0] sm:$0xff]
    %v190 = vld [vmem:[#allocation5 + $0x2f8] sm:$0xff]
    %v191 = vld [vmem:[#allocation5 + $0x300] sm:$0xff]
    %v192 = vld [vmem:[#allocation5 + $0x308] sm:$0xff]
    %v193 = vld [vmem:[#allocation5 + $0x310] sm:$0xff]
    %v194 = vld [vmem:[#allocation5 + $0x318] sm:$0xff]
    %v195 = vld [vmem:[#allocation5 + $0x320] sm:$0xff]
    %v196 = vld [vmem:[#allocation5 + $0x328] sm:$0xff]
    %v197 = vld [vmem:[#allocation5 + $0x330] sm:$0xff]
    %v198 = vld [vmem:[#allocation5 + $0x338] sm:$0xff]
    %v199 = vld [vmem:[#allocation5 + $0x340] sm:$0xff]
    %v200 = vld [vmem:[#allocation5 + $0x348] sm:$0xff]
    %v201 = vld [vmem:[#allocation5 + $0x350] sm:$0xff]
    %v202 = vld [vmem:[#allocation5 + $0x358] sm:$0xff]
    %v203 = vld [vmem:[#allocation5 + $0x360] sm:$0xff]
    %v204 = vld [vmem:[#allocation5 + $0x368] sm:$0xff]
    %v205 = vld [vmem:[#allocation5 + $0x370] sm:$0xff]
    %v206 = vld [vmem:[#allocation5 + $0x378] sm:$0xff]
    %v207 = vld [vmem:[#allocation5 + $0x380] sm:$0xff]
    %v208 = vld [vmem:[#allocation5 + $0x388] sm:$0xff]
    %v209 = vld [vmem:[#allocation5 + $0x390] sm:$0xff]
    %v210 = vld [vmem:[#allocation5 + $0x398] sm:$0xff]
    %v211 = vld [vmem:[#allocation5 + $0x3a0] sm:$0xff]
    %v212 = vld [vmem:[#allocation5 + $0x3a8] sm:$0xff]
    %v213 = vld [vmem:[#allocation5 + $0x3b0] sm:$0xff]
    %v214 = vld [vmem:[#allocation5 + $0x3b8] sm:$0xff]
    %v215 = vld [vmem:[#allocation5 + $0x3c0] sm:$0xff]
    %v216 = vld [vmem:[#allocation5 + $0x3c8] sm:$0xff]
    %v217 = vld [vmem:[#allocation5 + $0x3d0] sm:$0xff]
    %v218 = vld [vmem:[#allocation5 + $0x3d8] sm:$0xff]
    %v219 = vld [vmem:[#allocation5 + $0x3e0] sm:$0xff]
    %v220 = vld [vmem:[#allocation5 + $0x3e8] sm:$0xff]
    %v221 = vld [vmem:[#allocation5 + $0x3f0] sm:$0xff]
    %v222 = vld [vmem:[#allocation5 + $0x3f8] sm:$0xff]
    %v223 = vld [vmem:[#allocation5 + $0x400] sm:$0xff]
    %v224 = vld [vmem:[#allocation5 + $0x408] sm:$0xff]
    %v225 = vld [vmem:[#allocation5 + $0x410] sm:$0xff]
    %v226 = vld [vmem:[#allocation5 + $0x418] sm:$0xff]
    %v227 = vld [vmem:[#allocation5 + $0x420] sm:$0xff]
    %v228 = vld [vmem:[#allocation5 + $0x428] sm:$0xff]
    %v229 = vld [vmem:[#allocation5 + $0x430] sm:$0xff]
    %v230 = vld [vmem:[#allocation5 + $0x438] sm:$0xff]
    %v231 = vld [vmem:[#allocation5 + $0x440] sm:$0xff]
    %v232 = vld [vmem:[#allocation5 + $0x448] sm:$0xff]
    %v233 = vld [vmem:[#allocation5 + $0x450] sm:$0xff]
    %v234 = vld [vmem:[#allocation5 + $0x458] sm:$0xff]
    %v235 = vld [vmem:[#allocation5 + $0x460] sm:$0xff]
    %v236 = vld [vmem:[#allocation5 + $0x468] sm:$0xff]
    %v237 = vld [vmem:[#allocation5 + $0x470] sm:$0xff]
    %v238 = vld [vmem:[#allocation5 + $0x478] sm:$0xff]
    %v239 = vld [vmem:[#allocation5 + $0x480] sm:$0xff]
    %v240 = vld [vmem:[#allocation5 + $0x488] sm:$0xff]
    %v241 = vld [vmem:[#allocation5 + $0x490] sm:$0xff]
    %v242 = vld [vmem:[#allocation5 + $0x498] sm:$0xff]
    %v243 = vld [vmem:[#allocation5 + $0x4a0] sm:$0xff]
    %v244 = vld [vmem:[#allocation5 + $0x4a8] sm:$0xff]
    %v245 = vld [vmem:[#allocation5 + $0x4b0] sm:$0xff]
    %v246 = vld [vmem:[#allocation5 + $0x4b8] sm:$0xff]
    %v247 = vld [vmem:[#allocation5 + $0x4c0] sm:$0xff]
    %v248 = vld [vmem:[#allocation5 + $0x4c8] sm:$0xff]
    %v249 = vld [vmem:[#allocation5 + $0x4d0] sm:$0xff]
    %v250 = vld [vmem:[#allocation5 + $0x4d8] sm:$0xff]
    %v251 = vld [vmem:[#allocation5 + $0x4e0] sm:$0xff]
    %v252 = vld [vmem:[#allocation5 + $0x4e8] sm:$0xff]
    %v253 = vld [vmem:[#allocation5 + $0x4f0] sm:$0xff]
    %v254 = vld [vmem:[#allocation5 + $0x4f8] sm:$0xff]
    %v255 = vld [vmem:[#allocation5 + $0x500] sm:$0xff]
    %v256 = vld [vmem:[#allocation5 + $0x508] sm:$0xff]
    %v257 = vld [vmem:[#allocation5 + $0x510] sm:$0xff]
    %v258 = vld [vmem:[#allocation5 + $0x518] sm:$0xff]
    %v259 = vld [vmem:[#allocation5 + $0x520] sm:$0xff]
    %v260 = vld [vmem:[#allocation5 + $0x528] sm:$0xff]
    %v261 = vld [vmem:[#allocation5 + $0x530] sm:$0xff]
    %v262 = vld [vmem:[#allocation5 + $0x538] sm:$0xff]
    %v263 = vld [vmem:[#allocation5 + $0x540] sm:$0xff]
    %v264 = vld [vmem:[#allocation5 + $0x548] sm:$0xff]
    %v265 = vld [vmem:[#allocation5 + $0x550] sm:$0xff]
    %v266 = vld [vmem:[#allocation5 + $0x558] sm:$0xff]
    %v267 = vld [vmem:[#allocation5 + $0x560] sm:$0xff]
    %v268 = vld [vmem:[#allocation5 + $0x568] sm:$0xff]
    %v269 = vld [vmem:[#allocation5 + $0x570] sm:$0xff]
    %v270 = vld [vmem:[#allocation5 + $0x578] sm:$0xff]
    %v271 = vld [vmem:[#allocation5 + $0x580] sm:$0xff]
    %v272 = vld [vmem:[#allocation5 + $0x588] sm:$0xff]
    %v273 = vld [vmem:[#allocation5 + $0x590] sm:$0xff]
    %v274 = vld [vmem:[#allocation5 + $0x598] sm:$0xff]
    %v275 = vld [vmem:[#allocation5 + $0x5a0] sm:$0xff]
    %v276 = vld [vmem:[#allocation5 + $0x5a8] sm:$0xff]
    %v277 = vld [vmem:[#allocation5 + $0x5b0] sm:$0xff]
    %v278 = vld [vmem:[#allocation5 + $0x5b8] sm:$0xff]
    %v279 = vld [vmem:[#allocation5 + $0x5c0] sm:$0xff]
    %v280 = vld [vmem:[#allocation5 + $0x5c8] sm:$0xff]
    %v281 = vld [vmem:[#allocation5 + $0x5d0] sm:$0xff]
    %v282 = vld [vmem:[#allocation5 + $0x5d8] sm:$0xff]
    %v283 = vld [vmem:[#allocation5 + $0x5e0] sm:$0xff]
    %v284 = vld [vmem:[#allocation5 + $0x5e8] sm:$0xff]
    %v285 = vld [vmem:[#allocation5 + $0x5f0] sm:$0xff]
    %v286 = vld [vmem:[#allocation5 + $0x5f8] sm:$0xff]
    %v287 = vld [vmem:[#allocation5 + $0x600] sm:$0xff]
    %v288 = vld [vmem:[#allocation5 + $0x608] sm:$0xff]
    %v289 = vld [vmem:[#allocation5 + $0x610] sm:$0xff]
    %v290 = vld [vmem:[#allocation5 + $0x618] sm:$0xff]
    %v291 = vld [vmem:[#allocation5 + $0x620] sm:$0xff]
    %v292 = vld [vmem:[#allocation5 + $0x628] sm:$0xff]
    %v293 = vld [vmem:[#allocation5 + $0x630] sm:$0xff]
    %v294 = vld [vmem:[#allocation5 + $0x638] sm:$0xff]
    %v295 = vld [vmem:[#allocation5 + $0x640] sm:$0xff]
    %v296 = vld [vmem:[#allocation5 + $0x648] sm:$0xff]
    %v297 = vld [vmem:[#allocation5 + $0x650] sm:$0xff]
    %v298 = vld [vmem:[#allocation5 + $0x658] sm:$0xff]
    %v299 = vld [vmem:[#allocation5 + $0x660] sm:$0xff]
    %v300 = vld [vmem:[#allocation5 + $0x668] sm:$0xff]
    %v301 = vld [vmem:[#allocation5 + $0x670] sm:$0xff]
    %v302 = vld [vmem:[#allocation5 + $0x678] sm:$0xff]
    %v303 = vld [vmem:[#allocation5 + $0x680] sm:$0xff]
    %v304 = vld [vmem:[#allocation5 + $0x688] sm:$0xff]
    %v305 = vld [vmem:[#allocation5 + $0x690] sm:$0xff]
    %v306 = vld [vmem:[#allocation5 + $0x698] sm:$0xff]
    %v307 = vld [vmem:[#allocation5 + $0x6a0] sm:$0xff]
    %v308 = vld [vmem:[#allocation5 + $0x6a8] sm:$0xff]
    %v309 = vld [vmem:[#allocation5 + $0x6b0] sm:$0xff]
    %v310 = vld [vmem:[#allocation5 + $0x6b8] sm:$0xff]
    %v311 = vld [vmem:[#allocation5 + $0x6c0] sm:$0xff]
    %v312 = vld [vmem:[#allocation5 + $0x6c8] sm:$0xff]
    %v313 = vld [vmem:[#allocation5 + $0x6d0] sm:$0xff]
    %v314 = vld [vmem:[#allocation5 + $0x6d8] sm:$0xff]
    %v315 = vld [vmem:[#allocation5 + $0x6e0] sm:$0xff]
    %v316 = vld [vmem:[#allocation5 + $0x6e8] sm:$0xff]
    %v317 = vld [vmem:[#allocation5 + $0x6f0] sm:$0xff]
    %v318 = vld [vmem:[#allocation5 + $0x6f8] sm:$0xff]
    %v319 = vld [vmem:[#allocation5 + $0x700] sm:$0xff]
    %v320 = vld [vmem:[#allocation5 + $0x708] sm:$0xff]
    %v321 = vld [vmem:[#allocation5 + $0x710] sm:$0xff]
    %v322 = vld [vmem:[#allocation5 + $0x718] sm:$0xff]
    %v323 = vld [vmem:[#allocation5 + $0x720] sm:$0xff]
    %v324 = vld [vmem:[#allocation5 + $0x728] sm:$0xff]
    %v325 = vld [vmem:[#allocation5 + $0x730] sm:$0xff]
    %v326 = vld [vmem:[#allocation5 + $0x738] sm:$0xff]
    %v327 = vld [vmem:[#allocation5 + $0x740] sm:$0xff]
    %v328 = vld [vmem:[#allocation5 + $0x748] sm:$0xff]
    %v329 = vld [vmem:[#allocation5 + $0x750] sm:$0xff]
    %v330 = vld [vmem:[#allocation5 + $0x758] sm:$0xff]
    %v331 = vld [vmem:[#allocation5 + $0x760] sm:$0xff]
    %v332 = vld [vmem:[#allocation5 + $0x768] sm:$0xff]
    %v333 = vld [vmem:[#allocation5 + $0x770] sm:$0xff]
    %v334 = vld [vmem:[#allocation5 + $0x778] sm:$0xff]
    %v335 = vld [vmem:[#allocation5 + $0x780] sm:$0xff]
    %v336 = vld [vmem:[#allocation5 + $0x788] sm:$0xff]
    %v337 = vld [vmem:[#allocation5 + $0x790] sm:$0xff]
    %v338 = vld [vmem:[#allocation5 + $0x798] sm:$0xff]
    %v339 = vld [vmem:[#allocation5 + $0x7a0] sm:$0xff]
    %v340 = vld [vmem:[#allocation5 + $0x7a8] sm:$0xff]
    %v341 = vld [vmem:[#allocation5 + $0x7b0] sm:$0xff]
    %v342 = vld [vmem:[#allocation5 + $0x7b8] sm:$0xff]
    %v343 = vld [vmem:[#allocation5 + $0x7c0] sm:$0xff]
    %v344 = vld [vmem:[#allocation5 + $0x7c8] sm:$0xff]
    %v345 = vld [vmem:[#allocation5 + $0x7d0] sm:$0xff]
    %v346 = vld [vmem:[#allocation5 + $0x7d8] sm:$0xff]
    %v347 = vld [vmem:[#allocation5 + $0x7e0] sm:$0xff]
    %v348 = vld [vmem:[#allocation5 + $0x7e8] sm:$0xff]
    %v349 = vld [vmem:[#allocation5 + $0x7f0] sm:$0xff]
    %v350 = vld [vmem:[#allocation5 + $0x7f8] sm:$0xff]
    %v351 = vld [vmem:[#allocation7] sm:$0xff]
    %v352 = vld [vmem:[#allocation7 + $0x8] sm:$0xff]
    %v353 = vld [vmem:[#allocation7 + $0x10] sm:$0xff]
    %v354 = vld [vmem:[#allocation7 + $0x18] sm:$0xff]
    %v355 = vld [vmem:[#allocation7 + $0x20] sm:$0xff]
    %v356 = vld [vmem:[#allocation7 + $0x28] sm:$0xff]
    %v357 = vld [vmem:[#allocation7 + $0x30] sm:$0xff]
    %v358 = vld [vmem:[#allocation7 + $0x38] sm:$0xff]
    %v359 = vld [vmem:[#allocation7 + $0x40] sm:$0xff]
    %v360 = vld [vmem:[#allocation7 + $0x48] sm:$0xff]
    %v361 = vld [vmem:[#allocation7 + $0x50] sm:$0xff]
    %v362 = vld [vmem:[#allocation7 + $0x58] sm:$0xff]
    %v363 = vld [vmem:[#allocation7 + $0x60] sm:$0xff]
    %v364 = vld [vmem:[#allocation7 + $0x68] sm:$0xff]
    %v365 = vld [vmem:[#allocation7 + $0x70] sm:$0xff]
    %v366 = vld [vmem:[#allocation7 + $0x78] sm:$0xff]
    %v367 = vld [vmem:[#allocation7 + $0x80] sm:$0xff]
    %v368 = vld [vmem:[#allocation7 + $0x88] sm:$0xff]
    %v369 = vld [vmem:[#allocation7 + $0x90] sm:$0xff]
    %v370 = vld [vmem:[#allocation7 + $0x98] sm:$0xff]
    %v371 = vld [vmem:[#allocation7 + $0xa0] sm:$0xff]
    %v372 = vld [vmem:[#allocation7 + $0xa8] sm:$0xff]
    %v373 = vld [vmem:[#allocation7 + $0xb0] sm:$0xff]
    %v374 = vld [vmem:[#allocation7 + $0xb8] sm:$0xff]
    %v375 = vld [vmem:[#allocation7 + $0xc0] sm:$0xff]
    %v376 = vld [vmem:[#allocation7 + $0xc8] sm:$0xff]
    %v377 = vld [vmem:[#allocation7 + $0xd0] sm:$0xff]
    %v378 = vld [vmem:[#allocation7 + $0xd8] sm:$0xff]
    %v379 = vld [vmem:[#allocation7 + $0xe0] sm:$0xff]
    %v380 = vld [vmem:[#allocation7 + $0xe8] sm:$0xff]
    %v381 = vld [vmem:[#allocation7 + $0xf0] sm:$0xff]
    %v382 = vld [vmem:[#allocation7 + $0xf8] sm:$0xff]
    %v383 = vld [vmem:[#allocation7 + $0x100] sm:$0xff]
    %v384 = vld [vmem:[#allocation7 + $0x108] sm:$0xff]
    %v385 = vld [vmem:[#allocation7 + $0x110] sm:$0xff]
    %v386 = vld [vmem:[#allocation7 + $0x118] sm:$0xff]
    %v387 = vld [vmem:[#allocation7 + $0x120] sm:$0xff]
    %v388 = vld [vmem:[#allocation7 + $0x128] sm:$0xff]
    %v389 = vld [vmem:[#allocation7 + $0x130] sm:$0xff]
    %v390 = vld [vmem:[#allocation7 + $0x138] sm:$0xff]
    %v391 = vld [vmem:[#allocation7 + $0x140] sm:$0xff]
    %v392 = vld [vmem:[#allocation7 + $0x148] sm:$0xff]
    %v393 = vld [vmem:[#allocation7 + $0x150] sm:$0xff]
    %v394 = vld [vmem:[#allocation7 + $0x158] sm:$0xff]
    %v395 = vld [vmem:[#allocation7 + $0x160] sm:$0xff]
    %v396 = vld [vmem:[#allocation7 + $0x168] sm:$0xff]
    %v397 = vld [vmem:[#allocation7 + $0x170] sm:$0xff]
    %v398 = vld [vmem:[#allocation7 + $0x178] sm:$0xff]
    %v399 = vld [vmem:[#allocation7 + $0x180] sm:$0xff]
    %v400 = vld [vmem:[#allocation7 + $0x188] sm:$0xff]
    %v401 = vld [vmem:[#allocation7 + $0x190] sm:$0xff]
    %v402 = vld [vmem:[#allocation7 + $0x198] sm:$0xff]
    %v403 = vld [vmem:[#allocation7 + $0x1a0] sm:$0xff]
    %v404 = vld [vmem:[#allocation7 + $0x1a8] sm:$0xff]
    %v405 = vld [vmem:[#allocation7 + $0x1b0] sm:$0xff]
    %v406 = vld [vmem:[#allocation7 + $0x1b8] sm:$0xff]
    %v407 = vld [vmem:[#allocation7 + $0x1c0] sm:$0xff]
    %v408 = vld [vmem:[#allocation7 + $0x1c8] sm:$0xff]
    %v409 = vld [vmem:[#allocation7 + $0x1d0] sm:$0xff]
    %v410 = vld [vmem:[#allocation7 + $0x1d8] sm:$0xff]
    %v411 = vld [vmem:[#allocation7 + $0x1e0] sm:$0xff]
    %v412 = vld [vmem:[#allocation7 + $0x1e8] sm:$0xff]
    %v413 = vld [vmem:[#allocation7 + $0x1f0] sm:$0xff]
    %v414 = vld [vmem:[#allocation7 + $0x1f8] sm:$0xff]
    %v415 = vld [vmem:[#allocation7 + $0x200] sm:$0xff]
    %v416 = vld [vmem:[#allocation7 + $0x208] sm:$0xff]
    %v417 = vld [vmem:[#allocation7 + $0x210] sm:$0xff]
    %v418 = vld [vmem:[#allocation7 + $0x218] sm:$0xff]
    %v419 = vld [vmem:[#allocation7 + $0x220] sm:$0xff]
    %v420 = vld [vmem:[#allocation7 + $0x228] sm:$0xff]
    %v421 = vld [vmem:[#allocation7 + $0x230] sm:$0xff]
    %v422 = vld [vmem:[#allocation7 + $0x238] sm:$0xff]
    %v423 = vld [vmem:[#allocation7 + $0x240] sm:$0xff]
    %v424 = vld [vmem:[#allocation7 + $0x248] sm:$0xff]
    %v425 = vld [vmem:[#allocation7 + $0x250] sm:$0xff]
    %v426 = vld [vmem:[#allocation7 + $0x258] sm:$0xff]
    %v427 = vld [vmem:[#allocation7 + $0x260] sm:$0xff]
    %v428 = vld [vmem:[#allocation7 + $0x268] sm:$0xff]
    %v429 = vld [vmem:[#allocation7 + $0x270] sm:$0xff]
    %v430 = vld [vmem:[#allocation7 + $0x278] sm:$0xff]
    %v431 = vld [vmem:[#allocation7 + $0x280] sm:$0xff]
    %v432 = vld [vmem:[#allocation7 + $0x288] sm:$0xff]
    %v433 = vld [vmem:[#allocation7 + $0x290] sm:$0xff]
    %v434 = vld [vmem:[#allocation7 + $0x298] sm:$0xff]
    %v435 = vld [vmem:[#allocation7 + $0x2a0] sm:$0xff]
    %v436 = vld [vmem:[#allocation7 + $0x2a8] sm:$0xff]
    %v437 = vld [vmem:[#allocation7 + $0x2b0] sm:$0xff]
    %v438 = vld [vmem:[#allocation7 + $0x2b8] sm:$0xff]
    %v439 = vld [vmem:[#allocation7 + $0x2c0] sm:$0xff]
    %v440 = vld [vmem:[#allocation7 + $0x2c8] sm:$0xff]
    %v441 = vld [vmem:[#allocation7 + $0x2d0] sm:$0xff]
    %v442 = vld [vmem:[#allocation7 + $0x2d8] sm:$0xff]
    %v443 = vld [vmem:[#allocation7 + $0x2e0] sm:$0xff]
    %v444 = vld [vmem:[#allocation7 + $0x2e8] sm:$0xff]
    %v445 = vld [vmem:[#allocation7 + $0x2f0] sm:$0xff]
    %v446 = vld [vmem:[#allocation7 + $0x2f8] sm:$0xff]
    %v447 = vld [vmem:[#allocation7 + $0x300] sm:$0xff]
    %v448 = vld [vmem:[#allocation7 + $0x308] sm:$0xff]
    %v449 = vld [vmem:[#allocation7 + $0x310] sm:$0xff]
    %v450 = vld [vmem:[#allocation7 + $0x318] sm:$0xff]
    %v451 = vld [vmem:[#allocation7 + $0x320] sm:$0xff]
    %v452 = vld [vmem:[#allocation7 + $0x328] sm:$0xff]
    %v453 = vld [vmem:[#allocation7 + $0x330] sm:$0xff]
    %v454 = vld [vmem:[#allocation7 + $0x338] sm:$0xff]
    %v455 = vld [vmem:[#allocation7 + $0x340] sm:$0xff]
    %v456 = vld [vmem:[#allocation7 + $0x348] sm:$0xff]
    %v457 = vld [vmem:[#allocation7 + $0x350] sm:$0xff]
    %v458 = vld [vmem:[#allocation7 + $0x358] sm:$0xff]
    %v459 = vld [vmem:[#allocation7 + $0x360] sm:$0xff]
    %v460 = vld [vmem:[#allocation7 + $0x368] sm:$0xff]
    %v461 = vld [vmem:[#allocation7 + $0x370] sm:$0xff]
    %v462 = vld [vmem:[#allocation7 + $0x378] sm:$0xff]
    %v463 = vld [vmem:[#allocation7 + $0x380] sm:$0xff]
    %v464 = vld [vmem:[#allocation7 + $0x388] sm:$0xff]
    %v465 = vld [vmem:[#allocation7 + $0x390] sm:$0xff]
    %v466 = vld [vmem:[#allocation7 + $0x398] sm:$0xff]
    %v467 = vld [vmem:[#allocation7 + $0x3a0] sm:$0xff]
    %v468 = vld [vmem:[#allocation7 + $0x3a8] sm:$0xff]
    %v469 = vld [vmem:[#allocation7 + $0x3b0] sm:$0xff]
    %v470 = vld [vmem:[#allocation7 + $0x3b8] sm:$0xff]
    %v471 = vld [vmem:[#allocation7 + $0x3c0] sm:$0xff]
    %v472 = vld [vmem:[#allocation7 + $0x3c8] sm:$0xff]
    %v473 = vld [vmem:[#allocation7 + $0x3d0] sm:$0xff]
    %v474 = vld [vmem:[#allocation7 + $0x3d8] sm:$0xff]
    %v475 = vld [vmem:[#allocation7 + $0x3e0] sm:$0xff]
    %v476 = vld [vmem:[#allocation7 + $0x3e8] sm:$0xff]
    %v477 = vld [vmem:[#allocation7 + $0x3f0] sm:$0xff]
    %v478 = vld [vmem:[#allocation7 + $0x3f8] sm:$0xff]
    %v479 = vld [vmem:[#allocation7 + $0x400] sm:$0xff]
    %v480 = vld [vmem:[#allocation7 + $0x408] sm:$0xff]
    %v481 = vld [vmem:[#allocation7 + $0x410] sm:$0xff]
    %v482 = vld [vmem:[#allocation7 + $0x418] sm:$0xff]
    %v483 = vld [vmem:[#allocation7 + $0x420] sm:$0xff]
    %v484 = vld [vmem:[#allocation7 + $0x428] sm:$0xff]
    %v485 = vld [vmem:[#allocation7 + $0x430] sm:$0xff]
    %v486 = vld [vmem:[#allocation7 + $0x438] sm:$0xff]
    %v487 = vld [vmem:[#allocation7 + $0x440] sm:$0xff]
    %v488 = vld [vmem:[#allocation7 + $0x448] sm:$0xff]
    %v489 = vld [vmem:[#allocation7 + $0x450] sm:$0xff]
    %v490 = vld [vmem:[#allocation7 + $0x458] sm:$0xff]
    %v491 = vld [vmem:[#allocation7 + $0x460] sm:$0xff]
    %v492 = vld [vmem:[#allocation7 + $0x468] sm:$0xff]
    %v493 = vld [vmem:[#allocation7 + $0x470] sm:$0xff]
    %v494 = vld [vmem:[#allocation7 + $0x478] sm:$0xff]
    %v495 = vld [vmem:[#allocation7 + $0x480] sm:$0xff]
    %v496 = vld [vmem:[#allocation7 + $0x488] sm:$0xff]
    %v497 = vld [vmem:[#allocation7 + $0x490] sm:$0xff]
    %v498 = vld [vmem:[#allocation7 + $0x498] sm:$0xff]
    %v499 = vld [vmem:[#allocation7 + $0x4a0] sm:$0xff]
    %v500 = vld [vmem:[#allocation7 + $0x4a8] sm:$0xff]
    %v501 = vld [vmem:[#allocation7 + $0x4b0] sm:$0xff]
    %v502 = vld [vmem:[#allocation7 + $0x4b8] sm:$0xff]
    %v503 = vld [vmem:[#allocation7 + $0x4c0] sm:$0xff]
    %v504 = vld [vmem:[#allocation7 + $0x4c8] sm:$0xff]
    %v505 = vld [vmem:[#allocation7 + $0x4d0] sm:$0xff]
    %v506 = vld [vmem:[#allocation7 + $0x4d8] sm:$0xff]
    %v507 = vld [vmem:[#allocation7 + $0x4e0] sm:$0xff]
    %v508 = vld [vmem:[#allocation7 + $0x4e8] sm:$0xff]
    %v509 = vld [vmem:[#allocation7 + $0x4f0] sm:$0xff]
    %v510 = vld [vmem:[#allocation7 + $0x4f8] sm:$0xff]
    %v511 = vld [vmem:[#allocation7 + $0x500] sm:$0xff]
    %v512 = vld [vmem:[#allocation7 + $0x508] sm:$0xff]
    %v513 = vld [vmem:[#allocation7 + $0x510] sm:$0xff]
    %v514 = vld [vmem:[#allocation7 + $0x518] sm:$0xff]
    %v515 = vld [vmem:[#allocation7 + $0x520] sm:$0xff]
    %v516 = vld [vmem:[#allocation7 + $0x528] sm:$0xff]
    %v517 = vld [vmem:[#allocation7 + $0x530] sm:$0xff]
    %v518 = vld [vmem:[#allocation7 + $0x538] sm:$0xff]
    %v519 = vld [vmem:[#allocation7 + $0x540] sm:$0xff]
    %v520 = vld [vmem:[#allocation7 + $0x548] sm:$0xff]
    %v521 = vld [vmem:[#allocation7 + $0x550] sm:$0xff]
    %v522 = vld [vmem:[#allocation7 + $0x558] sm:$0xff]
    %v523 = vld [vmem:[#allocation7 + $0x560] sm:$0xff]
    %v524 = vld [vmem:[#allocation7 + $0x568] sm:$0xff]
    %v525 = vld [vmem:[#allocation7 + $0x570] sm:$0xff]
    %v526 = vld [vmem:[#allocation7 + $0x578] sm:$0xff]
    %v527 = vld [vmem:[#allocation7 + $0x580] sm:$0xff]
    %v528 = vld [vmem:[#allocation7 + $0x588] sm:$0xff]
    %v529 = vld [vmem:[#allocation7 + $0x590] sm:$0xff]
    %v530 = vld [vmem:[#allocation7 + $0x598] sm:$0xff]
    %v531 = vld [vmem:[#allocation7 + $0x5a0] sm:$0xff]
    %v532 = vld [vmem:[#allocation7 + $0x5a8] sm:$0xff]
    %v533 = vld [vmem:[#allocation7 + $0x5b0] sm:$0xff]
    %v534 = vld [vmem:[#allocation7 + $0x5b8] sm:$0xff]
    %v535 = vld [vmem:[#allocation7 + $0x5c0] sm:$0xff]
    %v536 = vld [vmem:[#allocation7 + $0x5c8] sm:$0xff]
    %v537 = vld [vmem:[#allocation7 + $0x5d0] sm:$0xff]
    %v538 = vld [vmem:[#allocation7 + $0x5d8] sm:$0xff]
    %v539 = vld [vmem:[#allocation7 + $0x5e0] sm:$0xff]
    %v540 = vld [vmem:[#allocation7 + $0x5e8] sm:$0xff]
    %v541 = vld [vmem:[#allocation7 + $0x5f0] sm:$0xff]
    %v542 = vld [vmem:[#allocation7 + $0x5f8] sm:$0xff]
    %v543 = vld [vmem:[#allocation7 + $0x600] sm:$0xff]
    %v544 = vld [vmem:[#allocation7 + $0x608] sm:$0xff]
    %v545 = vld [vmem:[#allocation7 + $0x610] sm:$0xff]
    %v546 = vld [vmem:[#allocation7 + $0x618] sm:$0xff]
    %v547 = vld [vmem:[#allocation7 + $0x620] sm:$0xff]
    %v548 = vld [vmem:[#allocation7 + $0x628] sm:$0xff]
    %v549 = vld [vmem:[#allocation7 + $0x630] sm:$0xff]
    %v550 = vld [vmem:[#allocation7 + $0x638] sm:$0xff]
    %v551 = vld [vmem:[#allocation7 + $0x640] sm:$0xff]
    %v552 = vld [vmem:[#allocation7 + $0x648] sm:$0xff]
    %v553 = vld [vmem:[#allocation7 + $0x650] sm:$0xff]
    %v554 = vld [vmem:[#allocation7 + $0x658] sm:$0xff]
    %v555 = vld [vmem:[#allocation7 + $0x660] sm:$0xff]
    %v556 = vld [vmem:[#allocation7 + $0x668] sm:$0xff]
    %v557 = vld [vmem:[#allocation7 + $0x670] sm:$0xff]
    %v558 = vld [vmem:[#allocation7 + $0x678] sm:$0xff]
    %v559 = vld [vmem:[#allocation7 + $0x680] sm:$0xff]
    %v560 = vld [vmem:[#allocation7 + $0x688] sm:$0xff]
    %v561 = vld [vmem:[#allocation7 + $0x690] sm:$0xff]
    %v562 = vld [vmem:[#allocation7 + $0x698] sm:$0xff]
    %v563 = vld [vmem:[#allocation7 + $0x6a0] sm:$0xff]
    %v564 = vld [vmem:[#allocation7 + $0x6a8] sm:$0xff]
    %v565 = vld [vmem:[#allocation7 + $0x6b0] sm:$0xff]
    %v566 = vld [vmem:[#allocation7 + $0x6b8] sm:$0xff]
    %v567 = vld [vmem:[#allocation7 + $0x6c0] sm:$0xff]
    %v568 = vld [vmem:[#allocation7 + $0x6c8] sm:$0xff]
    %v569 = vld [vmem:[#allocation7 + $0x6d0] sm:$0xff]
    %v570 = vld [vmem:[#allocation7 + $0x6d8] sm:$0xff]
    %v571 = vld [vmem:[#allocation7 + $0x6e0] sm:$0xff]
    %v572 = vld [vmem:[#allocation7 + $0x6e8] sm:$0xff]
    %v573 = vld [vmem:[#allocation7 + $0x6f0] sm:$0xff]
    %v574 = vld [vmem:[#allocation7 + $0x6f8] sm:$0xff]
    %v575 = vld [vmem:[#allocation7 + $0x700] sm:$0xff]
    %v576 = vld [vmem:[#allocation7 + $0x708] sm:$0xff]
    %v577 = vld [vmem:[#allocation7 + $0x710] sm:$0xff]
    %v578 = vld [vmem:[#allocation7 + $0x718] sm:$0xff]
    %v579 = vld [vmem:[#allocation7 + $0x720] sm:$0xff]
    %v580 = vld [vmem:[#allocation7 + $0x728] sm:$0xff]
    %v581 = vld [vmem:[#allocation7 + $0x730] sm:$0xff]
    %v582 = vld [vmem:[#allocation7 + $0x738] sm:$0xff]
    %v583 = vld [vmem:[#allocation7 + $0x740] sm:$0xff]
    %v584 = vld [vmem:[#allocation7 + $0x748] sm:$0xff]
    %v585 = vld [vmem:[#allocation7 + $0x750] sm:$0xff]
    %v586 = vld [vmem:[#allocation7 + $0x758] sm:$0xff]
    %v587 = vld [vmem:[#allocation7 + $0x760] sm:$0xff]
    %v588 = vld [vmem:[#allocation7 + $0x768] sm:$0xff]
    %v589 = vld [vmem:[#allocation7 + $0x770] sm:$0xff]
    %v590 = vld [vmem:[#allocation7 + $0x778] sm:$0xff]
    %v591 = vld [vmem:[#allocation7 + $0x780] sm:$0xff]
    %v592 = vld [vmem:[#allocation7 + $0x788] sm:$0xff]
    %v593 = vld [vmem:[#allocation7 + $0x790] sm:$0xff]
    %v594 = vld [vmem:[#allocation7 + $0x798] sm:$0xff]
    %v595 = vld [vmem:[#allocation7 + $0x7a0] sm:$0xff]
    %v596 = vld [vmem:[#allocation7 + $0x7a8] sm:$0xff]
    %v597 = vld [vmem:[#allocation7 + $0x7b0] sm:$0xff]
    %v598 = vld [vmem:[#allocation7 + $0x7b8] sm:$0xff]
    %v599 = vld [vmem:[#allocation7 + $0x7c0] sm:$0xff]
    %v600 = vld [vmem:[#allocation7 + $0x7c8] sm:$0xff]
    %v601 = vld [vmem:[#allocation7 + $0x7d0] sm:$0xff]
    %v602 = vld [vmem:[#allocation7 + $0x7d8] sm:$0xff]
    %v603 = vld [vmem:[#allocation7 + $0x7e0] sm:$0xff]
    %v604 = vld [vmem:[#allocation7 + $0x7e8] sm:$0xff]
    %v605 = vld [vmem:[#allocation7 + $0x7f0] sm:$0xff]
    %v606 = vld [vmem:[#allocation7 + $0x7f8] sm:$0xff]
    %607 = vmatpush.msra.mxu0 %v366
    %608 = vmatpush.msra.mxu0 %v365
    %609 = vmatpush.msra.mxu0 %v364
    %610 = vmatpush.msra.mxu0 %v363
    %611 = vmatpush.msra.mxu0 %v362
    %612 = vmatpush.msra.mxu0 %v361
    %613 = vmatpush.msra.mxu0 %v360
    %614 = vmatpush.msra.mxu0 %v359
    %615 = vmatpush.msra.mxu0 %v358
    %616 = vmatpush.msra.mxu0 %v357
    %617 = vmatpush.msra.mxu0 %v356
    %618 = vmatpush.msra.mxu0 %v355
    %619 = vmatpush.msra.mxu0 %v354
    %620 = vmatpush.msra.mxu0 %v353
    %621 = vmatpush.msra.mxu0 %v352
    %622 = vmatpush.msra.mxu0 %v351
    %623 = vmatmul.f32.gmra.mxu0 %v63
    %v624 = vpop.f32.mrf.mxu0
    %v625 = vadd.f32 0.0, %v624
    %626 = vdwg.mxu0
    %627 = vmatpush.msra.mxu0 %v382
    %628 = vmatpush.msra.mxu0 %v381
    %629 = vmatpush.msra.mxu0 %v380
    %630 = vmatpush.msra.mxu0 %v379
    %631 = vmatpush.msra.mxu0 %v378
    %632 = vmatpush.msra.mxu0 %v377
    %633 = vmatpush.msra.mxu0 %v376
    %634 = vmatpush.msra.mxu0 %v375
    %635 = vmatpush.msra.mxu0 %v374
    %636 = vmatpush.msra.mxu0 %v373
    %637 = vmatpush.msra.mxu0 %v372
    %638 = vmatpush.msra.mxu0 %v371
    %639 = vmatpush.msra.mxu0 %v370
    %640 = vmatpush.msra.mxu0 %v369
    %641 = vmatpush.msra.mxu0 %v368
    %642 = vmatpush.msra.mxu0 %v367
    %643 = vmatmul.f32.gmra.mxu0 %v64
    %v644 = vpop.f32.mrf.mxu0
    %v645 = vadd.f32 %v625, %v644
    %646 = vdwg.mxu0
    %647 = vmatpush.msra.mxu0 %v398
    %648 = vmatpush.msra.mxu0 %v397
    %649 = vmatpush.msra.mxu0 %v396
    %650 = vmatpush.msra.mxu0 %v395
    %651 = vmatpush.msra.mxu0 %v394
    %652 = vmatpush.msra.mxu0 %v393
    %653 = vmatpush.msra.mxu0 %v392
    %654 = vmatpush.msra.mxu0 %v391
    %655 = vmatpush.msra.mxu0 %v390
    %656 = vmatpush.msra.mxu0 %v389
    %657 = vmatpush.msra.mxu0 %v388
    %658 = vmatpush.msra.mxu0 %v387
    %659 = vmatpush.msra.mxu0 %v386
    %660 = vmatpush.msra.mxu0 %v385
    %661 = vmatpush.msra.mxu0 %v384
    %662 = vmatpush.msra.mxu0 %v383
    %663 = vmatmul.f32.gmra.mxu0 %v65
    %v664 = vpop.f32.mrf.mxu0
    %v665 = vadd.f32 %v645, %v664
    %666 = vdwg.mxu0
    %667 = vmatpush.msra.mxu0 %v414
    %668 = vmatpush.msra.mxu0 %v413
    %669 = vmatpush.msra.mxu0 %v412
    %670 = vmatpush.msra.mxu0 %v411
    %671 = vmatpush.msra.mxu0 %v410
    %672 = vmatpush.msra.mxu0 %v409
    %673 = vmatpush.msra.mxu0 %v408
    %674 = vmatpush.msra.mxu0 %v407
    %675 = vmatpush.msra.mxu0 %v406
    %676 = vmatpush.msra.mxu0 %v405
    %677 = vmatpush.msra.mxu0 %v404
    %678 = vmatpush.msra.mxu0 %v403
    %679 = vmatpush.msra.mxu0 %v402
    %680 = vmatpush.msra.mxu0 %v401
    %681 = vmatpush.msra.mxu0 %v400
    %682 = vmatpush.msra.mxu0 %v399
    %683 = vmatmul.f32.gmra.mxu0 %v66
    %v684 = vpop.f32.mrf.mxu0
    %v685 = vadd.f32 %v665, %v684
    %686 = vdwg.mxu0
    %687 = vmatpush.msra.mxu0 %v430
    %688 = vmatpush.msra.mxu0 %v429
    %689 = vmatpush.msra.mxu0 %v428
    %690 = vmatpush.msra.mxu0 %v427
    %691 = vmatpush.msra.mxu0 %v426
    %692 = vmatpush.msra.mxu0 %v425
    %693 = vmatpush.msra.mxu0 %v424
    %694 = vmatpush.msra.mxu0 %v423
    %695 = vmatpush.msra.mxu0 %v422
    %696 = vmatpush.msra.mxu0 %v421
    %697 = vmatpush.msra.mxu0 %v420
    %698 = vmatpush.msra.mxu0 %v419
    %699 = vmatpush.msra.mxu0 %v418
    %700 = vmatpush.msra.mxu0 %v417
    %701 = vmatpush.msra.mxu0 %v416
    %702 = vmatpush.msra.mxu0 %v415
    %703 = vmatmul.f32.gmra.mxu0 %v67
    %v704 = vpop.f32.mrf.mxu0
    %v705 = vadd.f32 %v685, %v704
    %706 = vdwg.mxu0
    %707 = vmatpush.msra.mxu0 %v446
    %708 = vmatpush.msra.mxu0 %v445
    %709 = vmatpush.msra.mxu0 %v444
    %710 = vmatpush.msra.mxu0 %v443
    %711 = vmatpush.msra.mxu0 %v442
    %712 = vmatpush.msra.mxu0 %v441
    %713 = vmatpush.msra.mxu0 %v440
    %714 = vmatpush.msra.mxu0 %v439
    %715 = vmatpush.msra.mxu0 %v438
    %716 = vmatpush.msra.mxu0 %v437
    %717 = vmatpush.msra.mxu0 %v436
    %718 = vmatpush.msra.mxu0 %v435
    %719 = vmatpush.msra.mxu0 %v434
    %720 = vmatpush.msra.mxu0 %v433
    %721 = vmatpush.msra.mxu0 %v432
    %722 = vmatpush.msra.mxu0 %v431
    %723 = vmatmul.f32.gmra.mxu0 %v68
    %v724 = vpop.f32.mrf.mxu0
    %v725 = vadd.f32 %v705, %v724
    %726 = vdwg.mxu0
    %727 = vmatpush.msra.mxu0 %v462
    %728 = vmatpush.msra.mxu0 %v461
    %729 = vmatpush.msra.mxu0 %v460
    %730 = vmatpush.msra.mxu0 %v459
    %731 = vmatpush.msra.mxu0 %v458
    %732 = vmatpush.msra.mxu0 %v457
    %733 = vmatpush.msra.mxu0 %v456
    %734 = vmatpush.msra.mxu0 %v455
    %735 = vmatpush.msra.mxu0 %v454
    %736 = vmatpush.msra.mxu0 %v453
    %737 = vmatpush.msra.mxu0 %v452
    %738 = vmatpush.msra.mxu0 %v451
    %739 = vmatpush.msra.mxu0 %v450
    %740 = vmatpush.msra.mxu0 %v449
    %741 = vmatpush.msra.mxu0 %v448
    %742 = vmatpush.msra.mxu0 %v447
    %743 = vmatmul.f32.gmra.mxu0 %v69
    %v744 = vpop.f32.mrf.mxu0
    %v745 = vadd.f32 %v725, %v744
    %746 = vdwg.mxu0
    %747 = vmatpush.msra.mxu0 %v478
    %748 = vmatpush.msra.mxu0 %v477
    %749 = vmatpush.msra.mxu0 %v476
    %750 = vmatpush.msra.mxu0 %v475
    %751 = vmatpush.msra.mxu0 %v474
    %752 = vmatpush.msra.mxu0 %v473
    %753 = vmatpush.msra.mxu0 %v472
    %754 = vmatpush.msra.mxu0 %v471
    %755 = vmatpush.msra.mxu0 %v470
    %756 = vmatpush.msra.mxu0 %v469
    %757 = vmatpush.msra.mxu0 %v468
    %758 = vmatpush.msra.mxu0 %v467
    %759 = vmatpush.msra.mxu0 %v466
    %760 = vmatpush.msra.mxu0 %v465
    %761 = vmatpush.msra.mxu0 %v464
    %762 = vmatpush.msra.mxu0 %v463
    %763 = vmatmul.f32.gmra.mxu0 %v70
    %v764 = vpop.f32.mrf.mxu0
    %v765 = vadd.f32 %v745, %v764
    %766 = vdwg.mxu0
    %767 = vmatpush.msra.mxu0 %v494
    %768 = vmatpush.msra.mxu0 %v493
    %769 = vmatpush.msra.mxu0 %v492
    %770 = vmatpush.msra.mxu0 %v491
    %771 = vmatpush.msra.mxu0 %v490
    %772 = vmatpush.msra.mxu0 %v489
    %773 = vmatpush.msra.mxu0 %v488
    %774 = vmatpush.msra.mxu0 %v487
    %775 = vmatpush.msra.mxu0 %v486
    %776 = vmatpush.msra.mxu0 %v485
    %777 = vmatpush.msra.mxu0 %v484
    %778 = vmatpush.msra.mxu0 %v483
    %779 = vmatpush.msra.mxu0 %v482
    %780 = vmatpush.msra.mxu0 %v481
    %781 = vmatpush.msra.mxu0 %v480
    %782 = vmatpush.msra.mxu0 %v479
    %783 = vmatmul.f32.gmra.mxu0 %v71
    %v784 = vpop.f32.mrf.mxu0
    %v785 = vadd.f32 %v765, %v784
    %786 = vdwg.mxu0
    %787 = vmatpush.msra.mxu0 %v510
    %788 = vmatpush.msra.mxu0 %v509
    %789 = vmatpush.msra.mxu0 %v508
    %790 = vmatpush.msra.mxu0 %v507
    %791 = vmatpush.msra.mxu0 %v506
    %792 = vmatpush.msra.mxu0 %v505
    %793 = vmatpush.msra.mxu0 %v504
    %794 = vmatpush.msra.mxu0 %v503
    %795 = vmatpush.msra.mxu0 %v502
    %796 = vmatpush.msra.mxu0 %v501
    %797 = vmatpush.msra.mxu0 %v500
    %798 = vmatpush.msra.mxu0 %v499
    %799 = vmatpush.msra.mxu0 %v498
    %800 = vmatpush.msra.mxu0 %v497
    %801 = vmatpush.msra.mxu0 %v496
    %802 = vmatpush.msra.mxu0 %v495
    %803 = vmatmul.f32.gmra.mxu0 %v72
    %v804 = vpop.f32.mrf.mxu0
    %v805 = vadd.f32 %v785, %v804
    %806 = vdwg.mxu0
    %807 = vmatpush.msra.mxu0 %v526
    %808 = vmatpush.msra.mxu0 %v525
    %809 = vmatpush.msra.mxu0 %v524
    %810 = vmatpush.msra.mxu0 %v523
    %811 = vmatpush.msra.mxu0 %v522
    %812 = vmatpush.msra.mxu0 %v521
    %813 = vmatpush.msra.mxu0 %v520
    %814 = vmatpush.msra.mxu0 %v519
    %815 = vmatpush.msra.mxu0 %v518
    %816 = vmatpush.msra.mxu0 %v517
    %817 = vmatpush.msra.mxu0 %v516
    %818 = vmatpush.msra.mxu0 %v515
    %819 = vmatpush.msra.mxu0 %v514
    %820 = vmatpush.msra.mxu0 %v513
    %821 = vmatpush.msra.mxu0 %v512
    %822 = vmatpush.msra.mxu0 %v511
    %823 = vmatmul.f32.gmra.mxu0 %v73
    %v824 = vpop.f32.mrf.mxu0
    %v825 = vadd.f32 %v805, %v824
    %826 = vdwg.mxu0
    %827 = vmatpush.msra.mxu0 %v542
    %828 = vmatpush.msra.mxu0 %v541
    %829 = vmatpush.msra.mxu0 %v540
    %830 = vmatpush.msra.mxu0 %v539
    %831 = vmatpush.msra.mxu0 %v538
    %832 = vmatpush.msra.mxu0 %v537
    %833 = vmatpush.msra.mxu0 %v536
    %834 = vmatpush.msra.mxu0 %v535
    %835 = vmatpush.msra.mxu0 %v534
    %836 = vmatpush.msra.mxu0 %v533
    %837 = vmatpush.msra.mxu0 %v532
    %838 = vmatpush.msra.mxu0 %v531
    %839 = vmatpush.msra.mxu0 %v530
    %840 = vmatpush.msra.mxu0 %v529
    %841 = vmatpush.msra.mxu0 %v528
    %842 = vmatpush.msra.mxu0 %v527
    %843 = vmatmul.f32.gmra.mxu0 %v74
    %v844 = vpop.f32.mrf.mxu0
    %v845 = vadd.f32 %v825, %v844
    %846 = vdwg.mxu0
    %847 = vmatpush.msra.mxu0 %v558
    %848 = vmatpush.msra.mxu0 %v557
    %849 = vmatpush.msra.mxu0 %v556
    %850 = vmatpush.msra.mxu0 %v555
    %851 = vmatpush.msra.mxu0 %v554
    %852 = vmatpush.msra.mxu0 %v553
    %853 = vmatpush.msra.mxu0 %v552
    %854 = vmatpush.msra.mxu0 %v551
    %855 = vmatpush.msra.mxu0 %v550
    %856 = vmatpush.msra.mxu0 %v549
    %857 = vmatpush.msra.mxu0 %v548
    %858 = vmatpush.msra.mxu0 %v547
    %859 = vmatpush.msra.mxu0 %v546
    %860 = vmatpush.msra.mxu0 %v545
    %861 = vmatpush.msra.mxu0 %v544
    %862 = vmatpush.msra.mxu0 %v543
    %863 = vmatmul.f32.gmra.mxu0 %v75
    %v864 = vpop.f32.mrf.mxu0
    %v865 = vadd.f32 %v845, %v864
    %866 = vdwg.mxu0
    %867 = vmatpush.msra.mxu0 %v574
    %868 = vmatpush.msra.mxu0 %v573
    %869 = vmatpush.msra.mxu0 %v572
    %870 = vmatpush.msra.mxu0 %v571
    %871 = vmatpush.msra.mxu0 %v570
    %872 = vmatpush.msra.mxu0 %v569
    %873 = vmatpush.msra.mxu0 %v568
    %874 = vmatpush.msra.mxu0 %v567
    %875 = vmatpush.msra.mxu0 %v566
    %876 = vmatpush.msra.mxu0 %v565
    %877 = vmatpush.msra.mxu0 %v564
    %878 = vmatpush.msra.mxu0 %v563
    %879 = vmatpush.msra.mxu0 %v562
    %880 = vmatpush.msra.mxu0 %v561
    %881 = vmatpush.msra.mxu0 %v560
    %882 = vmatpush.msra.mxu0 %v559
    %883 = vmatmul.f32.gmra.mxu0 %v76
    %v884 = vpop.f32.mrf.mxu0
    %v885 = vadd.f32 %v865, %v884
    %886 = vdwg.mxu0
    %887 = vmatpush.msra.mxu0 %v590
    %888 = vmatpush.msra.mxu0 %v589
    %889 = vmatpush.msra.mxu0 %v588
    %890 = vmatpush.msra.mxu0 %v587
    %891 = vmatpush.msra.mxu0 %v586
    %892 = vmatpush.msra.mxu0 %v585
    %893 = vmatpush.msra.mxu0 %v584
    %894 = vmatpush.msra.mxu0 %v583
    %895 = vmatpush.msra.mxu0 %v582
    %896 = vmatpush.msra.mxu0 %v581
    %897 = vmatpush.msra.mxu0 %v580
    %898 = vmatpush.msra.mxu0 %v579
    %899 = vmatpush.msra.mxu0 %v578
    %900 = vmatpush.msra.mxu0 %v577
    %901 = vmatpush.msra.mxu0 %v576
    %902 = vmatpush.msra.mxu0 %v575
    %903 = vmatmul.f32.gmra.mxu0 %v77
    %v904 = vpop.f32.mrf.mxu0
    %v905 = vadd.f32 %v885, %v904
    %906 = vdwg.mxu0
    %907 = vmatpush.msra.mxu0 %v606
    %908 = vmatpush.msra.mxu0 %v605
    %909 = vmatpush.msra.mxu0 %v604
    %910 = vmatpush.msra.mxu0 %v603
    %911 = vmatpush.msra.mxu0 %v602
    %912 = vmatpush.msra.mxu0 %v601
    %913 = vmatpush.msra.mxu0 %v600
    %914 = vmatpush.msra.mxu0 %v599
    %915 = vmatpush.msra.mxu0 %v598
    %916 = vmatpush.msra.mxu0 %v597
    %917 = vmatpush.msra.mxu0 %v596
    %918 = vmatpush.msra.mxu0 %v595
    %919 = vmatpush.msra.mxu0 %v594
    %920 = vmatpush.msra.mxu0 %v593
    %921 = vmatpush.msra.mxu0 %v592
    %922 = vmatpush.msra.mxu0 %v591
    %923 = vmatmul.f32.gmra.mxu0 %v78
    %v924 = vpop.f32.mrf.mxu0
    %v925 = vadd.f32 %v905, %v924
    %926 = vdwg.mxu0
    %927 = vmatpush.msra.mxu0 %v110
    %928 = vmatpush.msra.mxu0 %v109
    %929 = vmatpush.msra.mxu0 %v108
    %930 = vmatpush.msra.mxu0 %v107
    %931 = vmatpush.msra.mxu0 %v106
    %932 = vmatpush.msra.mxu0 %v105
    %933 = vmatpush.msra.mxu0 %v104
    %934 = vmatpush.msra.mxu0 %v103
    %935 = vmatpush.msra.mxu0 %v102
    %936 = vmatpush.msra.mxu0 %v101
    %937 = vmatpush.msra.mxu0 %v100
    %938 = vmatpush.msra.mxu0 %v99
    %939 = vmatpush.msra.mxu0 %v98
    %940 = vmatpush.msra.mxu0 %v97
    %941 = vmatpush.msra.mxu0 %v96
    %942 = vmatpush.msra.mxu0 %v95
    %943 = vmatmul.f32.gmra.mxu0 %v79
    %v944 = vpop.f32.mrf.mxu0
    %v945 = vadd.f32 %v925, %v944
    %946 = vdwg.mxu0
    %947 = vmatpush.msra.mxu0 %v126
    %948 = vmatpush.msra.mxu0 %v125
    %949 = vmatpush.msra.mxu0 %v124
    %950 = vmatpush.msra.mxu0 %v123
    %951 = vmatpush.msra.mxu0 %v122
    %952 = vmatpush.msra.mxu0 %v121
    %953 = vmatpush.msra.mxu0 %v120
    %954 = vmatpush.msra.mxu0 %v119
    %955 = vmatpush.msra.mxu0 %v118
    %956 = vmatpush.msra.mxu0 %v117
    %957 = vmatpush.msra.mxu0 %v116
    %958 = vmatpush.msra.mxu0 %v115
    %959 = vmatpush.msra.mxu0 %v114
    %960 = vmatpush.msra.mxu0 %v113
    %961 = vmatpush.msra.mxu0 %v112
    %962 = vmatpush.msra.mxu0 %v111
    %963 = vmatmul.f32.gmra.mxu0 %v80
    %v964 = vpop.f32.mrf.mxu0
    %v965 = vadd.f32 %v945, %v964
    %966 = vdwg.mxu0
    %967 = vmatpush.msra.mxu0 %v142
    %968 = vmatpush.msra.mxu0 %v141
    %969 = vmatpush.msra.mxu0 %v140
    %970 = vmatpush.msra.mxu0 %v139
    %971 = vmatpush.msra.mxu0 %v138
    %972 = vmatpush.msra.mxu0 %v137
    %973 = vmatpush.msra.mxu0 %v136
    %974 = vmatpush.msra.mxu0 %v135
    %975 = vmatpush.msra.mxu0 %v134
    %976 = vmatpush.msra.mxu0 %v133
    %977 = vmatpush.msra.mxu0 %v132
    %978 = vmatpush.msra.mxu0 %v131
    %979 = vmatpush.msra.mxu0 %v130
    %980 = vmatpush.msra.mxu0 %v129
    %981 = vmatpush.msra.mxu0 %v128
    %982 = vmatpush.msra.mxu0 %v127
    %983 = vmatmul.f32.gmra.mxu0 %v81
    %v984 = vpop.f32.mrf.mxu0
    %v985 = vadd.f32 %v965, %v984
    %986 = vdwg.mxu0
    %987 = vmatpush.msra.mxu0 %v158
    %988 = vmatpush.msra.mxu0 %v157
    %989 = vmatpush.msra.mxu0 %v156
    %990 = vmatpush.msra.mxu0 %v155
    %991 = vmatpush.msra.mxu0 %v154
    %992 = vmatpush.msra.mxu0 %v153
    %993 = vmatpush.msra.mxu0 %v152
    %994 = vmatpush.msra.mxu0 %v151
    %995 = vmatpush.msra.mxu0 %v150
    %996 = vmatpush.msra.mxu0 %v149
    %997 = vmatpush.msra.mxu0 %v148
    %998 = vmatpush.msra.mxu0 %v147
    %999 = vmatpush.msra.mxu0 %v146
    %1000 = vmatpush.msra.mxu0 %v145
    %1001 = vmatpush.msra.mxu0 %v144
    %1002 = vmatpush.msra.mxu0 %v143
    %1003 = vmatmul.f32.gmra.mxu0 %v82
    %v1004 = vpop.f32.mrf.mxu0
    %v1005 = vadd.f32 %v985, %v1004
    %1006 = vdwg.mxu0
    %1007 = vmatpush.msra.mxu0 %v174
    %1008 = vmatpush.msra.mxu0 %v173
    %1009 = vmatpush.msra.mxu0 %v172
    %1010 = vmatpush.msra.mxu0 %v171
    %1011 = vmatpush.msra.mxu0 %v170
    %1012 = vmatpush.msra.mxu0 %v169
    %1013 = vmatpush.msra.mxu0 %v168
    %1014 = vmatpush.msra.mxu0 %v167
    %1015 = vmatpush.msra.mxu0 %v166
    %1016 = vmatpush.msra.mxu0 %v165
    %1017 = vmatpush.msra.mxu0 %v164
    %1018 = vmatpush.msra.mxu0 %v163
    %1019 = vmatpush.msra.mxu0 %v162
    %1020 = vmatpush.msra.mxu0 %v161
    %1021 = vmatpush.msra.mxu0 %v160
    %1022 = vmatpush.msra.mxu0 %v159
    %1023 = vmatmul.f32.gmra.mxu0 %v83
    %v1024 = vpop.f32.mrf.mxu0
    %v1025 = vadd.f32 %v1005, %v1024
    %1026 = vdwg.mxu0
    %1027 = vmatpush.msra.mxu0 %v190
    %1028 = vmatpush.msra.mxu0 %v189
    %1029 = vmatpush.msra.mxu0 %v188
    %1030 = vmatpush.msra.mxu0 %v187
    %1031 = vmatpush.msra.mxu0 %v186
    %1032 = vmatpush.msra.mxu0 %v185
    %1033 = vmatpush.msra.mxu0 %v184
    %1034 = vmatpush.msra.mxu0 %v183
    %1035 = vmatpush.msra.mxu0 %v182
    %1036 = vmatpush.msra.mxu0 %v181
    %1037 = vmatpush.msra.mxu0 %v180
    %1038 = vmatpush.msra.mxu0 %v179
    %1039 = vmatpush.msra.mxu0 %v178
    %1040 = vmatpush.msra.mxu0 %v177
    %1041 = vmatpush.msra.mxu0 %v176
    %1042 = vmatpush.msra.mxu0 %v175
    %1043 = vmatmul.f32.gmra.mxu0 %v84
    %v1044 = vpop.f32.mrf.mxu0
    %v1045 = vadd.f32 %v1025, %v1044
    %1046 = vdwg.mxu0
    %1047 = vmatpush.msra.mxu0 %v206
    %1048 = vmatpush.msra.mxu0 %v205
    %1049 = vmatpush.msra.mxu0 %v204
    %1050 = vmatpush.msra.mxu0 %v203
    %1051 = vmatpush.msra.mxu0 %v202
    %1052 = vmatpush.msra.mxu0 %v201
    %1053 = vmatpush.msra.mxu0 %v200
    %1054 = vmatpush.msra.mxu0 %v199
    %1055 = vmatpush.msra.mxu0 %v198
    %1056 = vmatpush.msra.mxu0 %v197
    %1057 = vmatpush.msra.mxu0 %v196
    %1058 = vmatpush.msra.mxu0 %v195
    %1059 = vmatpush.msra.mxu0 %v194
    %1060 = vmatpush.msra.mxu0 %v193
    %1061 = vmatpush.msra.mxu0 %v192
    %1062 = vmatpush.msra.mxu0 %v191
    %1063 = vmatmul.f32.gmra.mxu0 %v85
    %v1064 = vpop.f32.mrf.mxu0
    %v1065 = vadd.f32 %v1045, %v1064
    %1066 = vdwg.mxu0
    %1067 = vmatpush.msra.mxu0 %v222
    %1068 = vmatpush.msra.mxu0 %v221
    %1069 = vmatpush.msra.mxu0 %v220
    %1070 = vmatpush.msra.mxu0 %v219
    %1071 = vmatpush.msra.mxu0 %v218
    %1072 = vmatpush.msra.mxu0 %v217
    %1073 = vmatpush.msra.mxu0 %v216
    %1074 = vmatpush.msra.mxu0 %v215
    %1075 = vmatpush.msra.mxu0 %v214
    %1076 = vmatpush.msra.mxu0 %v213
    %1077 = vmatpush.msra.mxu0 %v212
    %1078 = vmatpush.msra.mxu0 %v211
    %1079 = vmatpush.msra.mxu0 %v210
    %1080 = vmatpush.msra.mxu0 %v209
    %1081 = vmatpush.msra.mxu0 %v208
    %1082 = vmatpush.msra.mxu0 %v207
    %1083 = vmatmul.f32.gmra.mxu0 %v86
    %v1084 = vpop.f32.mrf.mxu0
    %v1085 = vadd.f32 %v1065, %v1084
    %1086 = vdwg.mxu0
    %1087 = vmatpush.msra.mxu0 %v238
    %1088 = vmatpush.msra.mxu0 %v237
    %1089 = vmatpush.msra.mxu0 %v236
    %1090 = vmatpush.msra.mxu0 %v235
    %1091 = vmatpush.msra.mxu0 %v234
    %1092 = vmatpush.msra.mxu0 %v233
    %1093 = vmatpush.msra.mxu0 %v232
    %1094 = vmatpush.msra.mxu0 %v231
    %1095 = vmatpush.msra.mxu0 %v230
    %1096 = vmatpush.msra.mxu0 %v229
    %1097 = vmatpush.msra.mxu0 %v228
    %1098 = vmatpush.msra.mxu0 %v227
    %1099 = vmatpush.msra.mxu0 %v226
    %1100 = vmatpush.msra.mxu0 %v225
    %1101 = vmatpush.msra.mxu0 %v224
    %1102 = vmatpush.msra.mxu0 %v223
    %1103 = vmatmul.f32.gmra.mxu0 %v87
    %v1104 = vpop.f32.mrf.mxu0
    %v1105 = vadd.f32 %v1085, %v1104
    %1106 = vdwg.mxu0
    %1107 = vmatpush.msra.mxu0 %v254
    %1108 = vmatpush.msra.mxu0 %v253
    %1109 = vmatpush.msra.mxu0 %v252
    %1110 = vmatpush.msra.mxu0 %v251
    %1111 = vmatpush.msra.mxu0 %v250
    %1112 = vmatpush.msra.mxu0 %v249
    %1113 = vmatpush.msra.mxu0 %v248
    %1114 = vmatpush.msra.mxu0 %v247
    %1115 = vmatpush.msra.mxu0 %v246
    %1116 = vmatpush.msra.mxu0 %v245
    %1117 = vmatpush.msra.mxu0 %v244
    %1118 = vmatpush.msra.mxu0 %v243
    %1119 = vmatpush.msra.mxu0 %v242
    %1120 = vmatpush.msra.mxu0 %v241
    %1121 = vmatpush.msra.mxu0 %v240
    %1122 = vmatpush.msra.mxu0 %v239
    %1123 = vmatmul.f32.gmra.mxu0 %v88
    %v1124 = vpop.f32.mrf.mxu0
    %v1125 = vadd.f32 %v1105, %v1124
    %1126 = vdwg.mxu0
    %1127 = vmatpush.msra.mxu0 %v270
    %1128 = vmatpush.msra.mxu0 %v269
    %1129 = vmatpush.msra.mxu0 %v268
    %1130 = vmatpush.msra.mxu0 %v267
    %1131 = vmatpush.msra.mxu0 %v266
    %1132 = vmatpush.msra.mxu0 %v265
    %1133 = vmatpush.msra.mxu0 %v264
    %1134 = vmatpush.msra.mxu0 %v263
    %1135 = vmatpush.msra.mxu0 %v262
    %1136 = vmatpush.msra.mxu0 %v261
    %1137 = vmatpush.msra.mxu0 %v260
    %1138 = vmatpush.msra.mxu0 %v259
    %1139 = vmatpush.msra.mxu0 %v258
    %1140 = vmatpush.msra.mxu0 %v257
    %1141 = vmatpush.msra.mxu0 %v256
    %1142 = vmatpush.msra.mxu0 %v255
    %1143 = vmatmul.f32.gmra.mxu0 %v89
    %v1144 = vpop.f32.mrf.mxu0
    %v1145 = vadd.f32 %v1125, %v1144
    %1146 = vdwg.mxu0
    %1147 = vmatpush.msra.mxu0 %v286
    %1148 = vmatpush.msra.mxu0 %v285
    %1149 = vmatpush.msra.mxu0 %v284
    %1150 = vmatpush.msra.mxu0 %v283
    %1151 = vmatpush.msra.mxu0 %v282
    %1152 = vmatpush.msra.mxu0 %v281
    %1153 = vmatpush.msra.mxu0 %v280
    %1154 = vmatpush.msra.mxu0 %v279
    %1155 = vmatpush.msra.mxu0 %v278
    %1156 = vmatpush.msra.mxu0 %v277
    %1157 = vmatpush.msra.mxu0 %v276
    %1158 = vmatpush.msra.mxu0 %v275
    %1159 = vmatpush.msra.mxu0 %v274
    %1160 = vmatpush.msra.mxu0 %v273
    %1161 = vmatpush.msra.mxu0 %v272
    %1162 = vmatpush.msra.mxu0 %v271
    %1163 = vmatmul.f32.gmra.mxu0 %v90
    %v1164 = vpop.f32.mrf.mxu0
    %v1165 = vadd.f32 %v1145, %v1164
    %1166 = vdwg.mxu0
    %1167 = vmatpush.msra.mxu0 %v302
    %1168 = vmatpush.msra.mxu0 %v301
    %1169 = vmatpush.msra.mxu0 %v300
    %1170 = vmatpush.msra.mxu0 %v299
    %1171 = vmatpush.msra.mxu0 %v298
    %1172 = vmatpush.msra.mxu0 %v297
    %1173 = vmatpush.msra.mxu0 %v296
    %1174 = vmatpush.msra.mxu0 %v295
    %1175 = vmatpush.msra.mxu0 %v294
    %1176 = vmatpush.msra.mxu0 %v293
    %1177 = vmatpush.msra.mxu0 %v292
    %1178 = vmatpush.msra.mxu0 %v291
    %1179 = vmatpush.msra.mxu0 %v290
    %1180 = vmatpush.msra.mxu0 %v289
    %1181 = vmatpush.msra.mxu0 %v288
    %1182 = vmatpush.msra.mxu0 %v287
    %1183 = vmatmul.f32.gmra.mxu0 %v91
    %v1184 = vpop.f32.mrf.mxu0
    %v1185 = vadd.f32 %v1165, %v1184
    %1186 = vdwg.mxu0
    %1187 = vmatpush.msra.mxu0 %v318
    %1188 = vmatpush.msra.mxu0 %v317
    %1189 = vmatpush.msra.mxu0 %v316
    %1190 = vmatpush.msra.mxu0 %v315
    %1191 = vmatpush.msra.mxu0 %v314
    %1192 = vmatpush.msra.mxu0 %v313
    %1193 = vmatpush.msra.mxu0 %v312
    %1194 = vmatpush.msra.mxu0 %v311
    %1195 = vmatpush.msra.mxu0 %v310
    %1196 = vmatpush.msra.mxu0 %v309
    %1197 = vmatpush.msra.mxu0 %v308
    %1198 = vmatpush.msra.mxu0 %v307
    %1199 = vmatpush.msra.mxu0 %v306
    %1200 = vmatpush.msra.mxu0 %v305
    %1201 = vmatpush.msra.mxu0 %v304
    %1202 = vmatpush.msra.mxu0 %v303
    %1203 = vmatmul.f32.gmra.mxu0 %v92
    %v1204 = vpop.f32.mrf.mxu0
    %v1205 = vadd.f32 %v1185, %v1204
    %1206 = vdwg.mxu0
    %1207 = vmatpush.msra.mxu0 %v334
    %1208 = vmatpush.msra.mxu0 %v333
    %1209 = vmatpush.msra.mxu0 %v332
    %1210 = vmatpush.msra.mxu0 %v331
    %1211 = vmatpush.msra.mxu0 %v330
    %1212 = vmatpush.msra.mxu0 %v329
    %1213 = vmatpush.msra.mxu0 %v328
    %1214 = vmatpush.msra.mxu0 %v327
    %1215 = vmatpush.msra.mxu0 %v326
    %1216 = vmatpush.msra.mxu0 %v325
    %1217 = vmatpush.msra.mxu0 %v324
    %1218 = vmatpush.msra.mxu0 %v323
    %1219 = vmatpush.msra.mxu0 %v322
    %1220 = vmatpush.msra.mxu0 %v321
    %1221 = vmatpush.msra.mxu0 %v320
    %1222 = vmatpush.msra.mxu0 %v319
    %1223 = vmatmul.f32.gmra.mxu0 %v93
    %v1224 = vpop.f32.mrf.mxu0
    %v1225 = vadd.f32 %v1205, %v1224
    %1226 = vdwg.mxu0
    %1227 = vmatpush.msra.mxu0 %v350
    %1228 = vmatpush.msra.mxu0 %v349
    %1229 = vmatpush.msra.mxu0 %v348
    %1230 = vmatpush.msra.mxu0 %v347
    %1231 = vmatpush.msra.mxu0 %v346
    %1232 = vmatpush.msra.mxu0 %v345
    %1233 = vmatpush.msra.mxu0 %v344
    %1234 = vmatpush.msra.mxu0 %v343
    %1235 = vmatpush.msra.mxu0 %v342
    %1236 = vmatpush.msra.mxu0 %v341
    %1237 = vmatpush.msra.mxu0 %v340
    %1238 = vmatpush.msra.mxu0 %v339
    %1239 = vmatpush.msra.mxu0 %v338
    %1240 = vmatpush.msra.mxu0 %v337
    %1241 = vmatpush.msra.mxu0 %v336
    %1242 = vmatpush.msra.mxu0 %v335
    %1243 = vmatmul.f32.gmra.mxu0 %v94
    %v1244 = vpop.f32.mrf.mxu0
    %v1245 = vadd.f32 %v1225, %v1244
    %1246 = vdwg.mxu0
    %v1247 = vld [vmem:[%s3] sm:$0x1]
    %v1249 = vperm.slane %v1247, 0
    %v1251 = vadd.f32 %v1245, %v1249
    %1252 = vst [vmem:[#allocation8] sm:$0xff] %v1251
    // Predicated region
    $region30: #{tpu_custom_call.1} parent=1 // pred_check
      _
    $region31: #{tpu_custom_call.1} parent=1 // pred_check_branch
      %1254 = sbr.rel (0) target = $region33
    $region32: #{tpu_custom_call.1} parent=1 // pred_region
      %1256 = vsyncadd [#allocation4], 0
      %s1258 = sshll.u32 [#allocation8], 4
      %s1259 = int_to_ptr.vmem [resolvable:$true] %s1258
      %s1260 = sshll.u32 %s4, 4
      %s1261 = int_to_ptr.hbm [resolvable:$true] %s1260
      %1263 = dma.vmem_to_hbm [thread:$0]  %s1259, 128, %s1261, [#allocation4]
    $region33: #{tpu_custom_call.1} parent=1 // pred_fallthru
      _
    // Predicated region
    $region34: #{tpu_custom_call.1} parent=1 // pred_check
      _
    $region35: #{tpu_custom_call.1} parent=1 // pred_check_branch
      %1265 = sbr.rel (0) target = $region37
    $region36: #{tpu_custom_call.1} parent=1 // pred_region
      %1267 = dma.done [#allocation4], 128
    $region37: #{tpu_custom_call.1} parent=1 // pred_fallthru
      _
    %1268 = vsyncpa [#allocation3], 1
    %1269 = vsyncpa [#allocation6], 1
    %1270 = vsyncpa [#allocation4], 1

</llo_original>
